<compile_context>
chip_gen: v5e
topology: v5e:2x2
jax: 0.10.0
libtpu: 0.0.40
codegen_flags: <defaults>
</compile_context>

<pallas_src>
import jax
import jax.numpy as jnp
from jax.experimental import pallas as pl
from jax.experimental.pallas import tpu as pltpu

EPS = 1e-5


def batchnorm_simplenet_kernel(
    x_ref, w1_ref, vecs_ref,
    w2_hbm, w3_hbm, w4_hbm, w5_hbm, wf_hbm,
    out_ref,
    wbuf, sem,
):
    """Fused 5x[Linear -> BatchNorm1d(train) -> ReLU] -> Linear.

    vecs_ref packing (f32, shape (16, width)):
      rows 0..4  : gamma for layers 1..5
      rows 5..9  : beta  for layers 1..5
      row  10    : final Linear bias, zero-padded to `width` lanes
    """
    batch = x_ref.shape[0]
    inv_b = 1.0 / batch

    def linear(h, w):
        # bf16 x bf16 MXU matmul, f32 accumulation.
        return jnp.dot(h.astype(w.dtype), w, preferred_element_type=jnp.float32)

    def bn_relu(z, layer):
        gamma = vecs_ref[layer, :]
        beta = vecs_ref[5 + layer, :]
        # Single-pass batch stats (biased variance, as in PyTorch training BN).
        mean = jnp.sum(z, axis=0, keepdims=True) * inv_b
        ex2 = jnp.sum(z * z, axis=0, keepdims=True) * inv_b
        var = ex2 - mean * mean
        scale = gamma * jax.lax.rsqrt(var + EPS)      # rsqrt on the EUP slot
        shift = beta - mean * scale
        return jnp.maximum(z * scale + shift, 0.0)

    def start_fetch(src_hbm, slot):
        pltpu.make_async_copy(src_hbm, wbuf.at[slot], sem.at[slot]).start()

    def wait_fetch(src_hbm, slot):
        pltpu.make_async_copy(src_hbm, wbuf.at[slot], sem.at[slot]).wait()

    hbm_weights = (w2_hbm, w3_hbm, w4_hbm, w5_hbm, wf_hbm)

    # Kick off the layer-2 weight DMA, then compute layer 1 on the resident w1.
    start_fetch(hbm_weights[0], 0)
    h = bn_relu(linear(x_ref[...], w1_ref[...]), 0)

    # Layers 2..5: wait for this layer's weights, prefetch the next, compute.
    for layer in range(1, 5):
        slot = (layer - 1) & 1
        wait_fetch(hbm_weights[layer - 1], slot)
        start_fetch(hbm_weights[layer], 1 - slot)
        h = bn_relu(linear(h, wbuf[slot]), layer)

    # Final Linear (lane-dense: padded to `width` columns; sliced in wrapper).
    wait_fetch(hbm_weights[4], 0)
    out = linear(h, wbuf[0]) + vecs_ref[10, :]
    out_ref[...] = out.astype(out_ref.dtype)


def batchnorm_simplenet_forward(x, params):
    """x: (B, inp_dim) float32. params: dict produced by init_params."""
    batch = x.shape[0]
    w1 = params["w"][0]
    width = w1.shape[1]
    wf = params["wf"]
    out_dim = wf.shape[1]
    assert out_dim <= width, "final out_dim must fit inside the padded width"

    # Pack gamma_1..5, beta_1..5 and the (padded) final bias into one slab.
    bf_row = jnp.zeros((width,), jnp.float32).at[:out_dim].set(params["bf"])
    rows = jnp.stack(list(params["gamma"]) + list(params["beta"]) + [bf_row])
    vecs = jnp.zeros((16, width), jnp.float32).at[: rows.shape[0]].set(rows)

    # Pad the final weight to (width, width) so it reuses the same HBM->VMEM
    # double buffer as w2..w5 and keeps the output lane-dense.
    wf_pad = jnp.zeros((width, width), wf.dtype).at[:, :out_dim].set(wf)

    vmem = pl.BlockSpec(memory_space=pltpu.MemorySpace.VMEM)
    hbm = pl.BlockSpec(memory_space=pl.ANY)

    out_padded = pl.pallas_call(
        batchnorm_simplenet_kernel,
        out_shape=jax.ShapeDtypeStruct((batch, width), jnp.float32),
        in_specs=[vmem, vmem, vmem, hbm, hbm, hbm, hbm, hbm],
        out_specs=vmem,
        scratch_shapes=[
            pltpu.VMEM((2, width, width), params["w"][1].dtype),  # weight double buffer
            pltpu.SemaphoreType.DMA((2,)),
        ],
        # Actual need is < 1 MiB; 16 MiB leaves plenty of headroom on every
        # generation (and stays well under v7x's 64 MiB physical VMEM).
        compiler_params=pltpu.CompilerParams(vmem_limit_bytes=16 << 20),
    )(x, w1, vecs, params["w"][1], params["w"][2], params["w"][3],
      params["w"][4], wf_pad)

    return out_padded[:, :out_dim]


def init_params(key, inp_dim, out_dim, width=256, weight_dtype=jnp.bfloat16):
    """Mimics nn.Linear default init (uniform(+-1/sqrt(fan_in))) and
    BatchNorm1d gamma=1, beta=0. Linear weights stored pre-transposed as
    (in_features, out_features) and cast to `weight_dtype` (bf16 for the MXU).
    Hidden-layer biases are kept only for the reference (BN cancels them)."""
    w_list, b_list, g_list, be_list = [], [], [], []
    dims = [(inp_dim, width)] + [(width, width)] * 4
    for i, (fan_in, fan_out) in enumerate(dims):
        kw, kb = jax.random.split(jax.random.fold_in(key, i))
        bound = 1.0 / (fan_in ** 0.5)
        w = jax.random.uniform(kw, (fan_in, fan_out), jnp.float32, -bound, bound)
        b = jax.random.uniform(kb, (fan_out,), jnp.float32, -bound, bound)
        w_list.append(w.astype(weight_dtype))
        b_list.append(b)
        g_list.append(jnp.ones((fan_out,), jnp.float32))
        be_list.append(jnp.zeros((fan_out,), jnp.float32))
    kw, kb = jax.random.split(jax.random.fold_in(key, 99))
    bound = 1.0 / (width ** 0.5)
    wf = jax.random.uniform(kw, (width, out_dim), jnp.float32, -bound, bound)
    bf = jax.random.uniform(kb, (out_dim,), jnp.float32, -bound, bound)
    return dict(w=w_list, b=b_list, gamma=g_list, beta=be_list,
                wf=wf.astype(weight_dtype), bf=bf)


def reference_forward(x, params, mirror_kernel_dtypes=True):
    """Pure-JAX PyTorch-style reference (Linear WITH bias, two-pass biased var).

    mirror_kernel_dtypes=True  : same bf16 weight / activation casts as the
                                 kernel (tight check of the kernel math).
    mirror_kernel_dtypes=False : full f32 math with the stored weight values
                                 (PyTorch-exact structure, looser check).
    """
    def prep_w(w):
        return w if mirror_kernel_dtypes else w.astype(jnp.float32)

    h = x
    for i in range(5):
        w = prep_w(params["w"][i])
        z = jnp.dot(h.astype(w.dtype), w,
                    preferred_element_type=jnp.float32) + params["b"][i]
        mean = jnp.mean(z, axis=0, keepdims=True)
        var = jnp.mean((z - mean) ** 2, axis=0, keepdims=True)   # biased var
        h = jnp.maximum((z - mean) * jax.lax.rsqrt(var + EPS)
                        * params["gamma"][i] + params["beta"][i], 0.0)
    wf = prep_w(params["wf"])
    return jnp.dot(h.astype(wf.dtype), wf,
                   preferred_element_type=jnp.float32) + params["bf"]


if __name__ == "__main__":
    key = jax.random.PRNGKey(0)
    k_x, k_p = jax.random.split(key)

    batch, inp_dim, out_dim, width = 8, 32, 16, 256
    x = jax.random.normal(k_x, (batch, inp_dim), jnp.float32)
    params = init_params(k_p, inp_dim, out_dim, width)

    out = jax.block_until_ready(batchnorm_simplenet_forward(x, params))
    assert out.shape == (batch, out_dim)

    # Tight check against a reference that uses the same bf16 matmul dtypes
    # (tolerance covers bf16 rounding-boundary flips between implementations).
    ref_bf16 = reference_forward(x, params, mirror_kernel_dtypes=True)
    assert jnp.allclose(out, ref_bf16, atol=5e-3, rtol=5e-3), \
        "mismatch vs bf16-matched reference"

    # Looser check against the full-f32 PyTorch-style forward (semantic check;
    # the only deviation is the bf16 activation casts inside the kernel).
    ref_f32 = reference_forward(x, params, mirror_kernel_dtypes=False)
    assert jnp.allclose(out, ref_f32, atol=2e-2, rtol=2e-2), \
        "mismatch vs f32 PyTorch-style reference"

    print("KERNEL_OK")
</pallas_src>

<mosaic_0001>
module attributes {stable_mosaic.version = 11 : i64} {
  func.func @batchnorm_simplenet_kernel(%arg0: memref<8x32xf32, #tpu.memory_space<vmem>>, %arg1: memref<32x256xbf16, #tpu.memory_space<vmem>>, %arg2: memref<16x256xf32, #tpu.memory_space<vmem>>, %arg3: memref<256x256xbf16, #tpu.memory_space<any>>, %arg4: memref<256x256xbf16, #tpu.memory_space<any>>, %arg5: memref<256x256xbf16, #tpu.memory_space<any>>, %arg6: memref<256x256xbf16, #tpu.memory_space<any>>, %arg7: memref<256x256xbf16, #tpu.memory_space<any>>, %arg8: memref<8x256xf32, #tpu.memory_space<vmem>>, %arg9: memref<2x256x256xbf16, #tpu.memory_space<vmem>>, %arg10: memref<2x!tpu.dma_semaphore, #tpu.memory_space<semaphore_mem>>) attributes {dimension_semantics = [], scalar_prefetch = 0 : i64, scratch_operands = 2 : i64, tpu.core_type = #tpu.core_type<tc>} {
    %c0_i32 = arith.constant 0 : i32
    %c0_i32_0 = arith.constant 0 : i32
    %c0_i32_1 = arith.constant 0 : i32
    %c0_i32_2 = arith.constant 0 : i32
    %0 = tpu.memref_slice %arg9[%c0_i32, %c0_i32_1, %c0_i32_2] : memref<2x256x256xbf16, #tpu.memory_space<vmem>> -> memref<1x256x256xbf16, #tpu.memory_space<vmem>>
    %1 = tpu.memref_squeeze %0 : memref<1x256x256xbf16, #tpu.memory_space<vmem>> -> memref<256x256xbf16, #tpu.memory_space<vmem>>
    %2 = tpu.memref_slice %arg10[%c0_i32_0] : memref<2x!tpu.dma_semaphore, #tpu.memory_space<semaphore_mem>> -> memref<1x!tpu.dma_semaphore, #tpu.memory_space<semaphore_mem>>
    %3 = tpu.memref_squeeze %2 : memref<1x!tpu.dma_semaphore, #tpu.memory_space<semaphore_mem>> -> memref<!tpu.dma_semaphore, #tpu.memory_space<semaphore_mem>>
    tpu.enqueue_dma source(%arg3 : memref<256x256xbf16, #tpu.memory_space<any>>) target(%1 : memref<256x256xbf16, #tpu.memory_space<vmem>>) target_semaphore(%3 : memref<!tpu.dma_semaphore, #tpu.memory_space<semaphore_mem>>)
    %c0 = arith.constant 0 : index
    %c0_3 = arith.constant 0 : index
    %4 = vector.load %arg0[%c0, %c0_3] : memref<8x32xf32, #tpu.memory_space<vmem>>, vector<8x32xf32>
    %c0_4 = arith.constant 0 : index
    %c0_5 = arith.constant 0 : index
    %5 = vector.load %arg1[%c0_4, %c0_5] : memref<32x256xbf16, #tpu.memory_space<vmem>>, vector<32x256xbf16>
    %6 = arith.truncf %4 : vector<8x32xf32> to vector<8x32xbf16>
    %cst = arith.constant dense<0.000000e+00> : vector<8x256xf32>
    %7 = tpu.matmul %6, %5, %cst {dimension_numbers = #tpu.dot_dimension_numbers<[1], [0], [0], [1], [0, 0, 1, 1], [], []>} : vector<8x32xbf16>, vector<32x256xbf16>, vector<8x256xf32> -> vector<8x256xf32>
    %c0_6 = arith.constant 0 : index
    %c0_7 = arith.constant 0 : index
    %8 = vector.load %arg2[%c0_6, %c0_7] : memref<16x256xf32, #tpu.memory_space<vmem>>, vector<1x256xf32>
    %9 = vector.shape_cast %8 : vector<1x256xf32> to vector<256xf32>
    %c5 = arith.constant 5 : index
    %c0_8 = arith.constant 0 : index
    %10 = vector.load %arg2[%c5, %c0_8] : memref<16x256xf32, #tpu.memory_space<vmem>>, vector<1x256xf32>
    %11 = vector.shape_cast %10 : vector<1x256xf32> to vector<256xf32>
    %cst_9 = arith.constant dense<0.000000e+00> : vector<256xf32>
    %12 = vector.multi_reduction <add>, %7, %cst_9 [0] : vector<8x256xf32> to vector<256xf32>
    %13 = vector.shape_cast %12 : vector<256xf32> to vector<1x256xf32>
    %cst_10 = arith.constant 1.250000e-01 : f32
    %14 = vector.broadcast %cst_10 : f32 to vector<1x256xf32>
    %15 = arith.mulf %13, %14 : vector<1x256xf32>
    %16 = arith.mulf %7, %7 : vector<8x256xf32>
    %cst_11 = arith.constant dense<0.000000e+00> : vector<256xf32>
    %17 = vector.multi_reduction <add>, %16, %cst_11 [0] : vector<8x256xf32> to vector<256xf32>
    %18 = vector.shape_cast %17 : vector<256xf32> to vector<1x256xf32>
    %cst_12 = arith.constant 1.250000e-01 : f32
    %19 = vector.broadcast %cst_12 : f32 to vector<1x256xf32>
    %20 = arith.mulf %18, %19 : vector<1x256xf32>
    %21 = arith.mulf %15, %15 : vector<1x256xf32>
    %22 = arith.subf %20, %21 : vector<1x256xf32>
    %cst_13 = arith.constant 9.99999974E-6 : f32
    %23 = vector.broadcast %cst_13 : f32 to vector<1x256xf32>
    %24 = arith.addf %22, %23 : vector<1x256xf32>
    %25 = math.rsqrt %24 : vector<1x256xf32>
    %26 = vector.shape_cast %9 : vector<256xf32> to vector<1x256xf32>
    %27 = arith.mulf %26, %25 : vector<1x256xf32>
    %28 = arith.mulf %15, %27 : vector<1x256xf32>
    %29 = vector.shape_cast %11 : vector<256xf32> to vector<1x256xf32>
    %30 = arith.subf %29, %28 : vector<1x256xf32>
    %31 = vector.broadcast %27 : vector<1x256xf32> to vector<8x256xf32>
    %32 = arith.mulf %7, %31 : vector<8x256xf32>
    %33 = vector.broadcast %30 : vector<1x256xf32> to vector<8x256xf32>
    %34 = arith.addf %32, %33 : vector<8x256xf32>
    %cst_14 = arith.constant 0.000000e+00 : f32
    %35 = vector.broadcast %cst_14 : f32 to vector<8x256xf32>
    %36 = arith.maximumf %34, %35 : vector<8x256xf32>
    %c0_i32_15 = arith.constant 0 : i32
    %c0_i32_16 = arith.constant 0 : i32
    %c0_i32_17 = arith.constant 0 : i32
    %c0_i32_18 = arith.constant 0 : i32
    %37 = tpu.memref_slice %arg9[%c0_i32_15, %c0_i32_17, %c0_i32_18] : memref<2x256x256xbf16, #tpu.memory_space<vmem>> -> memref<1x256x256xbf16, #tpu.memory_space<vmem>>
    %38 = tpu.memref_squeeze %37 : memref<1x256x256xbf16, #tpu.memory_space<vmem>> -> memref<256x256xbf16, #tpu.memory_space<vmem>>
    %39 = tpu.memref_slice %arg10[%c0_i32_16] : memref<2x!tpu.dma_semaphore, #tpu.memory_space<semaphore_mem>> -> memref<1x!tpu.dma_semaphore, #tpu.memory_space<semaphore_mem>>
    %40 = tpu.memref_squeeze %39 : memref<1x!tpu.dma_semaphore, #tpu.memory_space<semaphore_mem>> -> memref<!tpu.dma_semaphore, #tpu.memory_space<semaphore_mem>>
    tpu.wait_dma2 semaphore(%40 : memref<!tpu.dma_semaphore, #tpu.memory_space<semaphore_mem>>) src(%arg3 : memref<256x256xbf16, #tpu.memory_space<any>>) dst(%38 : memref<256x256xbf16, #tpu.memory_space<vmem>>)
    %c1_i32 = arith.constant 1 : i32
    %c1_i32_19 = arith.constant 1 : i32
    %c0_i32_20 = arith.constant 0 : i32
    %c0_i32_21 = arith.constant 0 : i32
    %41 = tpu.memref_slice %arg9[%c1_i32, %c0_i32_20, %c0_i32_21] : memref<2x256x256xbf16, #tpu.memory_space<vmem>> -> memref<1x256x256xbf16, #tpu.memory_space<vmem>>
    %42 = tpu.memref_squeeze %41 : memref<1x256x256xbf16, #tpu.memory_space<vmem>> -> memref<256x256xbf16, #tpu.memory_space<vmem>>
    %43 = tpu.memref_slice %arg10[%c1_i32_19] : memref<2x!tpu.dma_semaphore, #tpu.memory_space<semaphore_mem>> -> memref<1x!tpu.dma_semaphore, #tpu.memory_space<semaphore_mem>>
    %44 = tpu.memref_squeeze %43 : memref<1x!tpu.dma_semaphore, #tpu.memory_space<semaphore_mem>> -> memref<!tpu.dma_semaphore, #tpu.memory_space<semaphore_mem>>
    tpu.enqueue_dma source(%arg4 : memref<256x256xbf16, #tpu.memory_space<any>>) target(%42 : memref<256x256xbf16, #tpu.memory_space<vmem>>) target_semaphore(%44 : memref<!tpu.dma_semaphore, #tpu.memory_space<semaphore_mem>>)
    %c0_22 = arith.constant 0 : index
    %c0_23 = arith.constant 0 : index
    %c0_24 = arith.constant 0 : index
    %45 = vector.load %arg9[%c0_22, %c0_23, %c0_24] : memref<2x256x256xbf16, #tpu.memory_space<vmem>>, vector<1x256x256xbf16>
    %46 = vector.shape_cast %45 : vector<1x256x256xbf16> to vector<256x256xbf16>
    %47 = arith.truncf %36 : vector<8x256xf32> to vector<8x256xbf16>
    %cst_25 = arith.constant dense<0.000000e+00> : vector<8x256xf32>
    %48 = tpu.matmul %47, %46, %cst_25 {dimension_numbers = #tpu.dot_dimension_numbers<[1], [0], [0], [1], [0, 0, 1, 1], [], []>} : vector<8x256xbf16>, vector<256x256xbf16>, vector<8x256xf32> -> vector<8x256xf32>
    %c1 = arith.constant 1 : index
    %c0_26 = arith.constant 0 : index
    %49 = vector.load %arg2[%c1, %c0_26] : memref<16x256xf32, #tpu.memory_space<vmem>>, vector<1x256xf32>
    %50 = vector.shape_cast %49 : vector<1x256xf32> to vector<256xf32>
    %c6 = arith.constant 6 : index
    %c0_27 = arith.constant 0 : index
    %51 = vector.load %arg2[%c6, %c0_27] : memref<16x256xf32, #tpu.memory_space<vmem>>, vector<1x256xf32>
    %52 = vector.shape_cast %51 : vector<1x256xf32> to vector<256xf32>
    %cst_28 = arith.constant dense<0.000000e+00> : vector<256xf32>
    %53 = vector.multi_reduction <add>, %48, %cst_28 [0] : vector<8x256xf32> to vector<256xf32>
    %54 = vector.shape_cast %53 : vector<256xf32> to vector<1x256xf32>
    %cst_29 = arith.constant 1.250000e-01 : f32
    %55 = vector.broadcast %cst_29 : f32 to vector<1x256xf32>
    %56 = arith.mulf %54, %55 : vector<1x256xf32>
    %57 = arith.mulf %48, %48 : vector<8x256xf32>
    %cst_30 = arith.constant dense<0.000000e+00> : vector<256xf32>
    %58 = vector.multi_reduction <add>, %57, %cst_30 [0] : vector<8x256xf32> to vector<256xf32>
    %59 = vector.shape_cast %58 : vector<256xf32> to vector<1x256xf32>
    %cst_31 = arith.constant 1.250000e-01 : f32
    %60 = vector.broadcast %cst_31 : f32 to vector<1x256xf32>
    %61 = arith.mulf %59, %60 : vector<1x256xf32>
    %62 = arith.mulf %56, %56 : vector<1x256xf32>
    %63 = arith.subf %61, %62 : vector<1x256xf32>
    %cst_32 = arith.constant 9.99999974E-6 : f32
    %64 = vector.broadcast %cst_32 : f32 to vector<1x256xf32>
    %65 = arith.addf %63, %64 : vector<1x256xf32>
    %66 = math.rsqrt %65 : vector<1x256xf32>
    %67 = vector.shape_cast %50 : vector<256xf32> to vector<1x256xf32>
    %68 = arith.mulf %67, %66 : vector<1x256xf32>
    %69 = arith.mulf %56, %68 : vector<1x256xf32>
    %70 = vector.shape_cast %52 : vector<256xf32> to vector<1x256xf32>
    %71 = arith.subf %70, %69 : vector<1x256xf32>
    %72 = vector.broadcast %68 : vector<1x256xf32> to vector<8x256xf32>
    %73 = arith.mulf %48, %72 : vector<8x256xf32>
    %74 = vector.broadcast %71 : vector<1x256xf32> to vector<8x256xf32>
    %75 = arith.addf %73, %74 : vector<8x256xf32>
    %cst_33 = arith.constant 0.000000e+00 : f32
    %76 = vector.broadcast %cst_33 : f32 to vector<8x256xf32>
    %77 = arith.maximumf %75, %76 : vector<8x256xf32>
    %c1_i32_34 = arith.constant 1 : i32
    %c1_i32_35 = arith.constant 1 : i32
    %c0_i32_36 = arith.constant 0 : i32
    %c0_i32_37 = arith.constant 0 : i32
    %78 = tpu.memref_slice %arg9[%c1_i32_34, %c0_i32_36, %c0_i32_37] : memref<2x256x256xbf16, #tpu.memory_space<vmem>> -> memref<1x256x256xbf16, #tpu.memory_space<vmem>>
    %79 = tpu.memref_squeeze %78 : memref<1x256x256xbf16, #tpu.memory_space<vmem>> -> memref<256x256xbf16, #tpu.memory_space<vmem>>
    %80 = tpu.memref_slice %arg10[%c1_i32_35] : memref<2x!tpu.dma_semaphore, #tpu.memory_space<semaphore_mem>> -> memref<1x!tpu.dma_semaphore, #tpu.memory_space<semaphore_mem>>
    %81 = tpu.memref_squeeze %80 : memref<1x!tpu.dma_semaphore, #tpu.memory_space<semaphore_mem>> -> memref<!tpu.dma_semaphore, #tpu.memory_space<semaphore_mem>>
    tpu.wait_dma2 semaphore(%81 : memref<!tpu.dma_semaphore, #tpu.memory_space<semaphore_mem>>) src(%arg4 : memref<256x256xbf16, #tpu.memory_space<any>>) dst(%79 : memref<256x256xbf16, #tpu.memory_space<vmem>>)
    %c0_i32_38 = arith.constant 0 : i32
    %c0_i32_39 = arith.constant 0 : i32
    %c0_i32_40 = arith.constant 0 : i32
    %c0_i32_41 = arith.constant 0 : i32
    %82 = tpu.memref_slice %arg9[%c0_i32_38, %c0_i32_40, %c0_i32_41] : memref<2x256x256xbf16, #tpu.memory_space<vmem>> -> memref<1x256x256xbf16, #tpu.memory_space<vmem>>
    %83 = tpu.memref_squeeze %82 : memref<1x256x256xbf16, #tpu.memory_space<vmem>> -> memref<256x256xbf16, #tpu.memory_space<vmem>>
    %84 = tpu.memref_slice %arg10[%c0_i32_39] : memref<2x!tpu.dma_semaphore, #tpu.memory_space<semaphore_mem>> -> memref<1x!tpu.dma_semaphore, #tpu.memory_space<semaphore_mem>>
    %85 = tpu.memref_squeeze %84 : memref<1x!tpu.dma_semaphore, #tpu.memory_space<semaphore_mem>> -> memref<!tpu.dma_semaphore, #tpu.memory_space<semaphore_mem>>
    tpu.enqueue_dma source(%arg5 : memref<256x256xbf16, #tpu.memory_space<any>>) target(%83 : memref<256x256xbf16, #tpu.memory_space<vmem>>) target_semaphore(%85 : memref<!tpu.dma_semaphore, #tpu.memory_space<semaphore_mem>>)
    %c1_42 = arith.constant 1 : index
    %c0_43 = arith.constant 0 : index
    %c0_44 = arith.constant 0 : index
    %86 = vector.load %arg9[%c1_42, %c0_43, %c0_44] : memref<2x256x256xbf16, #tpu.memory_space<vmem>>, vector<1x256x256xbf16>
    %87 = vector.shape_cast %86 : vector<1x256x256xbf16> to vector<256x256xbf16>
    %88 = arith.truncf %77 : vector<8x256xf32> to vector<8x256xbf16>
    %cst_45 = arith.constant dense<0.000000e+00> : vector<8x256xf32>
    %89 = tpu.matmul %88, %87, %cst_45 {dimension_numbers = #tpu.dot_dimension_numbers<[1], [0], [0], [1], [0, 0, 1, 1], [], []>} : vector<8x256xbf16>, vector<256x256xbf16>, vector<8x256xf32> -> vector<8x256xf32>
    %c2 = arith.constant 2 : index
    %c0_46 = arith.constant 0 : index
    %90 = vector.load %arg2[%c2, %c0_46] : memref<16x256xf32, #tpu.memory_space<vmem>>, vector<1x256xf32>
    %91 = vector.shape_cast %90 : vector<1x256xf32> to vector<256xf32>
    %c7 = arith.constant 7 : index
    %c0_47 = arith.constant 0 : index
    %92 = vector.load %arg2[%c7, %c0_47] : memref<16x256xf32, #tpu.memory_space<vmem>>, vector<1x256xf32>
    %93 = vector.shape_cast %92 : vector<1x256xf32> to vector<256xf32>
    %cst_48 = arith.constant dense<0.000000e+00> : vector<256xf32>
    %94 = vector.multi_reduction <add>, %89, %cst_48 [0] : vector<8x256xf32> to vector<256xf32>
    %95 = vector.shape_cast %94 : vector<256xf32> to vector<1x256xf32>
    %cst_49 = arith.constant 1.250000e-01 : f32
    %96 = vector.broadcast %cst_49 : f32 to vector<1x256xf32>
    %97 = arith.mulf %95, %96 : vector<1x256xf32>
    %98 = arith.mulf %89, %89 : vector<8x256xf32>
    %cst_50 = arith.constant dense<0.000000e+00> : vector<256xf32>
    %99 = vector.multi_reduction <add>, %98, %cst_50 [0] : vector<8x256xf32> to vector<256xf32>
    %100 = vector.shape_cast %99 : vector<256xf32> to vector<1x256xf32>
    %cst_51 = arith.constant 1.250000e-01 : f32
    %101 = vector.broadcast %cst_51 : f32 to vector<1x256xf32>
    %102 = arith.mulf %100, %101 : vector<1x256xf32>
    %103 = arith.mulf %97, %97 : vector<1x256xf32>
    %104 = arith.subf %102, %103 : vector<1x256xf32>
    %cst_52 = arith.constant 9.99999974E-6 : f32
    %105 = vector.broadcast %cst_52 : f32 to vector<1x256xf32>
    %106 = arith.addf %104, %105 : vector<1x256xf32>
    %107 = math.rsqrt %106 : vector<1x256xf32>
    %108 = vector.shape_cast %91 : vector<256xf32> to vector<1x256xf32>
    %109 = arith.mulf %108, %107 : vector<1x256xf32>
    %110 = arith.mulf %97, %109 : vector<1x256xf32>
    %111 = vector.shape_cast %93 : vector<256xf32> to vector<1x256xf32>
    %112 = arith.subf %111, %110 : vector<1x256xf32>
    %113 = vector.broadcast %109 : vector<1x256xf32> to vector<8x256xf32>
    %114 = arith.mulf %89, %113 : vector<8x256xf32>
    %115 = vector.broadcast %112 : vector<1x256xf32> to vector<8x256xf32>
    %116 = arith.addf %114, %115 : vector<8x256xf32>
    %cst_53 = arith.constant 0.000000e+00 : f32
    %117 = vector.broadcast %cst_53 : f32 to vector<8x256xf32>
    %118 = arith.maximumf %116, %117 : vector<8x256xf32>
    %c0_i32_54 = arith.constant 0 : i32
    %c0_i32_55 = arith.constant 0 : i32
    %c0_i32_56 = arith.constant 0 : i32
    %c0_i32_57 = arith.constant 0 : i32
    %119 = tpu.memref_slice %arg9[%c0_i32_54, %c0_i32_56, %c0_i32_57] : memref<2x256x256xbf16, #tpu.memory_space<vmem>> -> memref<1x256x256xbf16, #tpu.memory_space<vmem>>
    %120 = tpu.memref_squeeze %119 : memref<1x256x256xbf16, #tpu.memory_space<vmem>> -> memref<256x256xbf16, #tpu.memory_space<vmem>>
    %121 = tpu.memref_slice %arg10[%c0_i32_55] : memref<2x!tpu.dma_semaphore, #tpu.memory_space<semaphore_mem>> -> memref<1x!tpu.dma_semaphore, #tpu.memory_space<semaphore_mem>>
    %122 = tpu.memref_squeeze %121 : memref<1x!tpu.dma_semaphore, #tpu.memory_space<semaphore_mem>> -> memref<!tpu.dma_semaphore, #tpu.memory_space<semaphore_mem>>
    tpu.wait_dma2 semaphore(%122 : memref<!tpu.dma_semaphore, #tpu.memory_space<semaphore_mem>>) src(%arg5 : memref<256x256xbf16, #tpu.memory_space<any>>) dst(%120 : memref<256x256xbf16, #tpu.memory_space<vmem>>)
    %c1_i32_58 = arith.constant 1 : i32
    %c1_i32_59 = arith.constant 1 : i32
    %c0_i32_60 = arith.constant 0 : i32
    %c0_i32_61 = arith.constant 0 : i32
    %123 = tpu.memref_slice %arg9[%c1_i32_58, %c0_i32_60, %c0_i32_61] : memref<2x256x256xbf16, #tpu.memory_space<vmem>> -> memref<1x256x256xbf16, #tpu.memory_space<vmem>>
    %124 = tpu.memref_squeeze %123 : memref<1x256x256xbf16, #tpu.memory_space<vmem>> -> memref<256x256xbf16, #tpu.memory_space<vmem>>
    %125 = tpu.memref_slice %arg10[%c1_i32_59] : memref<2x!tpu.dma_semaphore, #tpu.memory_space<semaphore_mem>> -> memref<1x!tpu.dma_semaphore, #tpu.memory_space<semaphore_mem>>
    %126 = tpu.memref_squeeze %125 : memref<1x!tpu.dma_semaphore, #tpu.memory_space<semaphore_mem>> -> memref<!tpu.dma_semaphore, #tpu.memory_space<semaphore_mem>>
    tpu.enqueue_dma source(%arg6 : memref<256x256xbf16, #tpu.memory_space<any>>) target(%124 : memref<256x256xbf16, #tpu.memory_space<vmem>>) target_semaphore(%126 : memref<!tpu.dma_semaphore, #tpu.memory_space<semaphore_mem>>)
    %c0_62 = arith.constant 0 : index
    %c0_63 = arith.constant 0 : index
    %c0_64 = arith.constant 0 : index
    %127 = vector.load %arg9[%c0_62, %c0_63, %c0_64] : memref<2x256x256xbf16, #tpu.memory_space<vmem>>, vector<1x256x256xbf16>
    %128 = vector.shape_cast %127 : vector<1x256x256xbf16> to vector<256x256xbf16>
    %129 = arith.truncf %118 : vector<8x256xf32> to vector<8x256xbf16>
    %cst_65 = arith.constant dense<0.000000e+00> : vector<8x256xf32>
    %130 = tpu.matmul %129, %128, %cst_65 {dimension_numbers = #tpu.dot_dimension_numbers<[1], [0], [0], [1], [0, 0, 1, 1], [], []>} : vector<8x256xbf16>, vector<256x256xbf16>, vector<8x256xf32> -> vector<8x256xf32>
    %c3 = arith.constant 3 : index
    %c0_66 = arith.constant 0 : index
    %131 = vector.load %arg2[%c3, %c0_66] : memref<16x256xf32, #tpu.memory_space<vmem>>, vector<1x256xf32>
    %132 = vector.shape_cast %131 : vector<1x256xf32> to vector<256xf32>
    %c8 = arith.constant 8 : index
    %c0_67 = arith.constant 0 : index
    %133 = vector.load %arg2[%c8, %c0_67] : memref<16x256xf32, #tpu.memory_space<vmem>>, vector<1x256xf32>
    %134 = vector.shape_cast %133 : vector<1x256xf32> to vector<256xf32>
    %cst_68 = arith.constant dense<0.000000e+00> : vector<256xf32>
    %135 = vector.multi_reduction <add>, %130, %cst_68 [0] : vector<8x256xf32> to vector<256xf32>
    %136 = vector.shape_cast %135 : vector<256xf32> to vector<1x256xf32>
    %cst_69 = arith.constant 1.250000e-01 : f32
    %137 = vector.broadcast %cst_69 : f32 to vector<1x256xf32>
    %138 = arith.mulf %136, %137 : vector<1x256xf32>
    %139 = arith.mulf %130, %130 : vector<8x256xf32>
    %cst_70 = arith.constant dense<0.000000e+00> : vector<256xf32>
    %140 = vector.multi_reduction <add>, %139, %cst_70 [0] : vector<8x256xf32> to vector<256xf32>
    %141 = vector.shape_cast %140 : vector<256xf32> to vector<1x256xf32>
    %cst_71 = arith.constant 1.250000e-01 : f32
    %142 = vector.broadcast %cst_71 : f32 to vector<1x256xf32>
    %143 = arith.mulf %141, %142 : vector<1x256xf32>
    %144 = arith.mulf %138, %138 : vector<1x256xf32>
    %145 = arith.subf %143, %144 : vector<1x256xf32>
    %cst_72 = arith.constant 9.99999974E-6 : f32
    %146 = vector.broadcast %cst_72 : f32 to vector<1x256xf32>
    %147 = arith.addf %145, %146 : vector<1x256xf32>
    %148 = math.rsqrt %147 : vector<1x256xf32>
    %149 = vector.shape_cast %132 : vector<256xf32> to vector<1x256xf32>
    %150 = arith.mulf %149, %148 : vector<1x256xf32>
    %151 = arith.mulf %138, %150 : vector<1x256xf32>
    %152 = vector.shape_cast %134 : vector<256xf32> to vector<1x256xf32>
    %153 = arith.subf %152, %151 : vector<1x256xf32>
    %154 = vector.broadcast %150 : vector<1x256xf32> to vector<8x256xf32>
    %155 = arith.mulf %130, %154 : vector<8x256xf32>
    %156 = vector.broadcast %153 : vector<1x256xf32> to vector<8x256xf32>
    %157 = arith.addf %155, %156 : vector<8x256xf32>
    %cst_73 = arith.constant 0.000000e+00 : f32
    %158 = vector.broadcast %cst_73 : f32 to vector<8x256xf32>
    %159 = arith.maximumf %157, %158 : vector<8x256xf32>
    %c1_i32_74 = arith.constant 1 : i32
    %c1_i32_75 = arith.constant 1 : i32
    %c0_i32_76 = arith.constant 0 : i32
    %c0_i32_77 = arith.constant 0 : i32
    %160 = tpu.memref_slice %arg9[%c1_i32_74, %c0_i32_76, %c0_i32_77] : memref<2x256x256xbf16, #tpu.memory_space<vmem>> -> memref<1x256x256xbf16, #tpu.memory_space<vmem>>
    %161 = tpu.memref_squeeze %160 : memref<1x256x256xbf16, #tpu.memory_space<vmem>> -> memref<256x256xbf16, #tpu.memory_space<vmem>>
    %162 = tpu.memref_slice %arg10[%c1_i32_75] : memref<2x!tpu.dma_semaphore, #tpu.memory_space<semaphore_mem>> -> memref<1x!tpu.dma_semaphore, #tpu.memory_space<semaphore_mem>>
    %163 = tpu.memref_squeeze %162 : memref<1x!tpu.dma_semaphore, #tpu.memory_space<semaphore_mem>> -> memref<!tpu.dma_semaphore, #tpu.memory_space<semaphore_mem>>
    tpu.wait_dma2 semaphore(%163 : memref<!tpu.dma_semaphore, #tpu.memory_space<semaphore_mem>>) src(%arg6 : memref<256x256xbf16, #tpu.memory_space<any>>) dst(%161 : memref<256x256xbf16, #tpu.memory_space<vmem>>)
    %c0_i32_78 = arith.constant 0 : i32
    %c0_i32_79 = arith.constant 0 : i32
    %c0_i32_80 = arith.constant 0 : i32
    %c0_i32_81 = arith.constant 0 : i32
    %164 = tpu.memref_slice %arg9[%c0_i32_78, %c0_i32_80, %c0_i32_81] : memref<2x256x256xbf16, #tpu.memory_space<vmem>> -> memref<1x256x256xbf16, #tpu.memory_space<vmem>>
    %165 = tpu.memref_squeeze %164 : memref<1x256x256xbf16, #tpu.memory_space<vmem>> -> memref<256x256xbf16, #tpu.memory_space<vmem>>
    %166 = tpu.memref_slice %arg10[%c0_i32_79] : memref<2x!tpu.dma_semaphore, #tpu.memory_space<semaphore_mem>> -> memref<1x!tpu.dma_semaphore, #tpu.memory_space<semaphore_mem>>
    %167 = tpu.memref_squeeze %166 : memref<1x!tpu.dma_semaphore, #tpu.memory_space<semaphore_mem>> -> memref<!tpu.dma_semaphore, #tpu.memory_space<semaphore_mem>>
    tpu.enqueue_dma source(%arg7 : memref<256x256xbf16, #tpu.memory_space<any>>) target(%165 : memref<256x256xbf16, #tpu.memory_space<vmem>>) target_semaphore(%167 : memref<!tpu.dma_semaphore, #tpu.memory_space<semaphore_mem>>)
    %c1_82 = arith.constant 1 : index
    %c0_83 = arith.constant 0 : index
    %c0_84 = arith.constant 0 : index
    %168 = vector.load %arg9[%c1_82, %c0_83, %c0_84] : memref<2x256x256xbf16, #tpu.memory_space<vmem>>, vector<1x256x256xbf16>
    %169 = vector.shape_cast %168 : vector<1x256x256xbf16> to vector<256x256xbf16>
    %170 = arith.truncf %159 : vector<8x256xf32> to vector<8x256xbf16>
    %cst_85 = arith.constant dense<0.000000e+00> : vector<8x256xf32>
    %171 = tpu.matmul %170, %169, %cst_85 {dimension_numbers = #tpu.dot_dimension_numbers<[1], [0], [0], [1], [0, 0, 1, 1], [], []>} : vector<8x256xbf16>, vector<256x256xbf16>, vector<8x256xf32> -> vector<8x256xf32>
    %c4 = arith.constant 4 : index
    %c0_86 = arith.constant 0 : index
    %172 = vector.load %arg2[%c4, %c0_86] : memref<16x256xf32, #tpu.memory_space<vmem>>, vector<1x256xf32>
    %173 = vector.shape_cast %172 : vector<1x256xf32> to vector<256xf32>
    %c9 = arith.constant 9 : index
    %c0_87 = arith.constant 0 : index
    %174 = vector.load %arg2[%c9, %c0_87] : memref<16x256xf32, #tpu.memory_space<vmem>>, vector<1x256xf32>
    %175 = vector.shape_cast %174 : vector<1x256xf32> to vector<256xf32>
    %cst_88 = arith.constant dense<0.000000e+00> : vector<256xf32>
    %176 = vector.multi_reduction <add>, %171, %cst_88 [0] : vector<8x256xf32> to vector<256xf32>
    %177 = vector.shape_cast %176 : vector<256xf32> to vector<1x256xf32>
    %cst_89 = arith.constant 1.250000e-01 : f32
    %178 = vector.broadcast %cst_89 : f32 to vector<1x256xf32>
    %179 = arith.mulf %177, %178 : vector<1x256xf32>
    %180 = arith.mulf %171, %171 : vector<8x256xf32>
    %cst_90 = arith.constant dense<0.000000e+00> : vector<256xf32>
    %181 = vector.multi_reduction <add>, %180, %cst_90 [0] : vector<8x256xf32> to vector<256xf32>
    %182 = vector.shape_cast %181 : vector<256xf32> to vector<1x256xf32>
    %cst_91 = arith.constant 1.250000e-01 : f32
    %183 = vector.broadcast %cst_91 : f32 to vector<1x256xf32>
    %184 = arith.mulf %182, %183 : vector<1x256xf32>
    %185 = arith.mulf %179, %179 : vector<1x256xf32>
    %186 = arith.subf %184, %185 : vector<1x256xf32>
    %cst_92 = arith.constant 9.99999974E-6 : f32
    %187 = vector.broadcast %cst_92 : f32 to vector<1x256xf32>
    %188 = arith.addf %186, %187 : vector<1x256xf32>
    %189 = math.rsqrt %188 : vector<1x256xf32>
    %190 = vector.shape_cast %173 : vector<256xf32> to vector<1x256xf32>
    %191 = arith.mulf %190, %189 : vector<1x256xf32>
    %192 = arith.mulf %179, %191 : vector<1x256xf32>
    %193 = vector.shape_cast %175 : vector<256xf32> to vector<1x256xf32>
    %194 = arith.subf %193, %192 : vector<1x256xf32>
    %195 = vector.broadcast %191 : vector<1x256xf32> to vector<8x256xf32>
    %196 = arith.mulf %171, %195 : vector<8x256xf32>
    %197 = vector.broadcast %194 : vector<1x256xf32> to vector<8x256xf32>
    %198 = arith.addf %196, %197 : vector<8x256xf32>
    %cst_93 = arith.constant 0.000000e+00 : f32
    %199 = vector.broadcast %cst_93 : f32 to vector<8x256xf32>
    %200 = arith.maximumf %198, %199 : vector<8x256xf32>
    %c0_i32_94 = arith.constant 0 : i32
    %c0_i32_95 = arith.constant 0 : i32
    %c0_i32_96 = arith.constant 0 : i32
    %c0_i32_97 = arith.constant 0 : i32
    %201 = tpu.memref_slice %arg9[%c0_i32_94, %c0_i32_96, %c0_i32_97] : memref<2x256x256xbf16, #tpu.memory_space<vmem>> -> memref<1x256x256xbf16, #tpu.memory_space<vmem>>
    %202 = tpu.memref_squeeze %201 : memref<1x256x256xbf16, #tpu.memory_space<vmem>> -> memref<256x256xbf16, #tpu.memory_space<vmem>>
    %203 = tpu.memref_slice %arg10[%c0_i32_95] : memref<2x!tpu.dma_semaphore, #tpu.memory_space<semaphore_mem>> -> memref<1x!tpu.dma_semaphore, #tpu.memory_space<semaphore_mem>>
    %204 = tpu.memref_squeeze %203 : memref<1x!tpu.dma_semaphore, #tpu.memory_space<semaphore_mem>> -> memref<!tpu.dma_semaphore, #tpu.memory_space<semaphore_mem>>
    tpu.wait_dma2 semaphore(%204 : memref<!tpu.dma_semaphore, #tpu.memory_space<semaphore_mem>>) src(%arg7 : memref<256x256xbf16, #tpu.memory_space<any>>) dst(%202 : memref<256x256xbf16, #tpu.memory_space<vmem>>)
    %c0_98 = arith.constant 0 : index
    %c0_99 = arith.constant 0 : index
    %c0_100 = arith.constant 0 : index
    %205 = vector.load %arg9[%c0_98, %c0_99, %c0_100] : memref<2x256x256xbf16, #tpu.memory_space<vmem>>, vector<1x256x256xbf16>
    %206 = vector.shape_cast %205 : vector<1x256x256xbf16> to vector<256x256xbf16>
    %207 = arith.truncf %200 : vector<8x256xf32> to vector<8x256xbf16>
    %cst_101 = arith.constant dense<0.000000e+00> : vector<8x256xf32>
    %208 = tpu.matmul %207, %206, %cst_101 {dimension_numbers = #tpu.dot_dimension_numbers<[1], [0], [0], [1], [0, 0, 1, 1], [], []>} : vector<8x256xbf16>, vector<256x256xbf16>, vector<8x256xf32> -> vector<8x256xf32>
    %c10 = arith.constant 10 : index
    %c0_102 = arith.constant 0 : index
    %209 = vector.load %arg2[%c10, %c0_102] : memref<16x256xf32, #tpu.memory_space<vmem>>, vector<1x256xf32>
    %210 = vector.shape_cast %209 : vector<1x256xf32> to vector<256xf32>
    %211 = vector.shape_cast %210 : vector<256xf32> to vector<1x256xf32>
    %212 = vector.broadcast %211 : vector<1x256xf32> to vector<8x256xf32>
    %213 = arith.addf %208, %212 : vector<8x256xf32>
    %c0_103 = arith.constant 0 : index
    %c0_104 = arith.constant 0 : index
    %214 = vector.load %arg8[%c0_103, %c0_104] : memref<8x256xf32, #tpu.memory_space<vmem>>, vector<8x256xf32>
    tpu.vector_store %arg8[%c0_103, %c0_104], %213 {strides = array<i32>} : memref<8x256xf32, #tpu.memory_space<vmem>>, vector<8x256xf32>,
    return
  }
}

</mosaic_0001>

<llo_original>
// kernel: tpu_custom_call.1
$region0: #{tpu_custom_call.1}
  #allocation0 [shape = 'u32[]', space=smem, size = 0x4, offset = 0x4, fixed_abs, tag = 'smem constant byte address 0x4 - core index']
  #allocation1 [shape = 'u32[72,128]{1,0:T(1,128)}', space=vmem, size = 0x9000, scoped, tag = 'internal scratch']
  #allocation2 [shape = 'bf16[2,256,256]{2,1,0:T(8,128)(2,1)}', space=vmem, size = 0x40000, scoped, tag = 'scratch operand']
  #allocation3 [shape = 's32[2]{0}', space=sflag, size = 0x8, scoped, tag = 'scratch operand']
  #allocation11 [shape = 's32[]', space=sflag, size = 0x4, offset = 0, fixed_abs, tag = 'sflag constant byte address 0x0 - dummy sync flag']
  #allocation12 [shape = 's32[]', space=sflag, size = 0x4, offset = 0, fixed_abs, tag = 'sflag constant byte address 0x0 - dummy sync flag']
  #allocation13 [shape = 'u32[]', space=smem, size = 0x4, offset = 0x44, fixed_abs, tag = 'smem constant byte address 0x44 - assertion arg 0']
  #allocation14 [shape = 'u32[]', space=smem, size = 0x4, offset = 0x48, fixed_abs, tag = 'smem constant byte address 0x48 - assertion arg 1']
  #allocation15 [shape = 's32[]', space=sflag, size = 0x4, offset = 0, fixed_abs, tag = 'sflag constant byte address 0x0 - dummy sync flag']
  #allocation16 [shape = 's32[]', space=sflag, size = 0x4, offset = 0, fixed_abs, tag = 'sflag constant byte address 0x0 - dummy sync flag']
  #allocation17 [shape = 's32[]', space=sflag, size = 0x4, offset = 0, fixed_abs, tag = 'sflag constant byte address 0x0 - dummy sync flag']
  #allocation18 [shape = 's32[]', space=sflag, size = 0x4, offset = 0, fixed_abs, tag = 'sflag constant byte address 0x0 - dummy sync flag']
  #allocation19 [shape = 's32[]', space=sflag, size = 0x4, offset = 0, fixed_abs, tag = 'sflag constant byte address 0x0 - dummy sync flag']
  #allocation20 [shape = 's32[]', space=sflag, size = 0x4, offset = 0, fixed_abs, tag = 'sflag constant byte address 0x0 - dummy sync flag']
  #allocation21 [shape = 's32[]', space=sflag, size = 0x4, offset = 0, fixed_abs, tag = 'sflag constant byte address 0x0 - dummy sync flag']
  #allocation22 [shape = 's32[]', space=sflag, size = 0x4, offset = 0, fixed_abs, tag = 'sflag constant byte address 0x0 - dummy sync flag']
  %s0 = inlined_call_operand.hbm [shape: f32[8,32], index: 0, kind: input, shape index: {}]
  %s1 = inlined_call_operand.hbm [shape: bf16[32,256], index: 1, kind: input, shape index: {}]
  %s2 = inlined_call_operand.hbm [shape: f32[16,256], index: 2, kind: input, shape index: {}]
  %s3 = inlined_call_operand.hbm [shape: bf16[256,256], index: 3, kind: input, shape index: {}]
  %s4 = inlined_call_operand.hbm [shape: bf16[256,256], index: 4, kind: input, shape index: {}]
  %s5 = inlined_call_operand.hbm [shape: bf16[256,256], index: 5, kind: input, shape index: {}]
  %s6 = inlined_call_operand.hbm [shape: bf16[256,256], index: 6, kind: input, shape index: {}]
  %s7 = inlined_call_operand.hbm [shape: bf16[256,256], index: 7, kind: input, shape index: {}]
  %s8 = inlined_call_operand.hbm [shape: f32[8,256], index: 8, kind: output, shape index: {}]
  %s9 = sld [smem:[#allocation0]]
  $region54: #{tpu_custom_call.1} parent=0
    _
  %s11 = ssub.s32 1, %s9
  %s12 = scalar_select 0, %s11, %s9
  $region1: #{tpu_custom_call.1} parent=0
    #allocation4 [shape = 'u8[4096]{0}', space=vmem, size = 0x1000, scoped, tag = 'input window, operand 0, single buffered']
    #allocation5 [shape = 's32[1]{0}', space=sflag, size = 0x4, scoped, tag = 'scoped memory for tpu_custom_call.1']
    #allocation6 [shape = 's32[1]{0}', space=sflag, size = 0x4, scoped, tag = 'scoped memory for tpu_custom_call.1']
    #allocation7 [shape = 'u8[16384]{0}', space=vmem, size = 0x4000, scoped, tag = 'input window, operand 1, single buffered']
    #allocation8 [shape = 's32[1]{0}', space=sflag, size = 0x4, scoped, tag = 'scoped memory for tpu_custom_call.1']
    #allocation9 [shape = 'u8[16384]{0}', space=vmem, size = 0x4000, scoped, tag = 'input window, operand 2, single buffered']
    #allocation10 [shape = 'u8[8192]{0}', space=vmem, size = 0x2000, scoped, tag = 'output window, operand 0, single buffered']
    %13 = vsyncpa [#allocation5], 0
    %14 = vsyncpa [#allocation8], 0
    %15 = vsyncpa [#allocation6], 0
    // Predicated region
    $region2: #{tpu_custom_call.1} parent=1 // pred_check
      _
    $region3: #{tpu_custom_call.1} parent=1 // pred_check_branch
      %17 = sbr.rel (0) target = $region5
    $region4: #{tpu_custom_call.1} parent=1 // pred_region
      %19 = vsyncadd [#allocation5], 0
      %s21 = sshll.u32 %s0, 4
      %s22 = int_to_ptr.hbm [resolvable:$true] %s21
      %s23 = sshll.u32 [#allocation4], 4
      %s24 = int_to_ptr.vmem [resolvable:$true] %s23
      %26 = dma.hbm_to_vmem [thread:$0]  %s22, 128, %s24, [#allocation5]
    $region5: #{tpu_custom_call.1} parent=1 // pred_fallthru
      _
    // Predicated region
    $region6: #{tpu_custom_call.1} parent=1 // pred_check
      _
    $region7: #{tpu_custom_call.1} parent=1 // pred_check_branch
      %28 = sbr.rel (0) target = $region9
    $region8: #{tpu_custom_call.1} parent=1 // pred_region
      %30 = vsyncadd [#allocation8], 0
      %s31 = sshll.u32 %s1, 4
      %s32 = int_to_ptr.hbm [resolvable:$true] %s31
      %s33 = sshll.u32 [#allocation7], 4
      %s34 = int_to_ptr.vmem [resolvable:$true] %s33
      %39 = dma.hbm_to_vmem [thread:$0]  %s32, 512, %s34, [#allocation8], 128, 128, 8
    $region9: #{tpu_custom_call.1} parent=1 // pred_fallthru
      _
    // Predicated region
    $region10: #{tpu_custom_call.1} parent=1 // pred_check
      _
    $region11: #{tpu_custom_call.1} parent=1 // pred_check_branch
      %41 = sbr.rel (0) target = $region13
    $region12: #{tpu_custom_call.1} parent=1 // pred_region
      %43 = vsyncadd [#allocation8], 0
      %s44 = sshll.u32 %s2, 4
      %s45 = int_to_ptr.hbm [resolvable:$true] %s44
      %s46 = sshll.u32 [#allocation9], 4
      %s47 = int_to_ptr.vmem [resolvable:$true] %s46
      %52 = dma.hbm_to_vmem [thread:$0]  %s45, 512, %s47, [#allocation8], 256, 256, 16
    $region13: #{tpu_custom_call.1} parent=1 // pred_fallthru
      _
    // Predicated region
    $region14: #{tpu_custom_call.1} parent=1 // pred_check
      _
    $region15: #{tpu_custom_call.1} parent=1 // pred_check_branch
      %54 = sbr.rel (0) target = $region17
    $region16: #{tpu_custom_call.1} parent=1 // pred_region
      %56 = dma.done [#allocation5], 128
    $region17: #{tpu_custom_call.1} parent=1 // pred_fallthru
      _
    // Predicated region
    $region18: #{tpu_custom_call.1} parent=1 // pred_check
      _
    $region19: #{tpu_custom_call.1} parent=1 // pred_check_branch
      %58 = sbr.rel (0) target = $region21
    $region20: #{tpu_custom_call.1} parent=1 // pred_region
      %60 = dma.done [#allocation8], 512
    $region21: #{tpu_custom_call.1} parent=1 // pred_fallthru
      _
    // Predicated region
    $region22: #{tpu_custom_call.1} parent=1 // pred_check
      _
    $region23: #{tpu_custom_call.1} parent=1 // pred_check_branch
      %62 = sbr.rel (0) target = $region25
    $region24: #{tpu_custom_call.1} parent=1 // pred_region
      %64 = dma.done [#allocation8], 512
    $region25: #{tpu_custom_call.1} parent=1 // pred_fallthru
      _
    // Predicated region
    $region26: #{tpu_custom_call.1} parent=1 // pred_check
      _
    $region27: #{tpu_custom_call.1} parent=1 // pred_check_branch
      %67 = sbr.rel target = $region29
    $region28: #{tpu_custom_call.1} parent=1 // pred_region
      %68 = sst [smem:[#allocation13]] [#allocation12]
      %69 = sst [smem:[#allocation14]] [#allocation11]
    $region29: #{tpu_custom_call.1} parent=1 // pred_fallthru
      _
    %71 = shalt.err (0)
    %s73 = sshll.u32 %s3, 4
    %s74 = int_to_ptr.hbm [resolvable:$true] %s73
    %s75 = sshll.u32 [#allocation2], 4
    %s76 = int_to_ptr.vmem [resolvable:$true] %s75
    %78 = dma.hbm_to_vmem [thread:$0]  %s74, 4096, %s76, [#allocation3]
    %v79 = vld [vmem:[#allocation4] sm:$0xff]
    %v80 = vld [vmem:[#allocation7] sm:$0xff]
    %v81 = vld [vmem:[#allocation7 + $0x8] sm:$0xff]
    %v82 = vld [vmem:[#allocation7 + $0x10] sm:$0xff]
    %v83 = vld [vmem:[#allocation7 + $0x18] sm:$0xff]
    %v84 = vpack.c.bf16 %v79, %v79
    %v89 = vunpack.c.l.b16 %v80
    %v90 = vunpack.c.h.b16 %v80
    %v91 = vunpack.c.l.b16 %v81
    %v92 = vunpack.c.h.b16 %v81
    %v93 = vunpack.c.l.b16 %v82
    %v94 = vunpack.c.h.b16 %v82
    %v95 = vunpack.c.l.b16 %v83
    %v96 = vunpack.c.h.b16 %v83
    %v97 = vpack.c.b16 %v91, %v89
    %v98 = vpack.c.b16 %v92, %v90
    %v99 = vpack.c.b16 %v95, %v93
    %v100 = vpack.c.b16 %v96, %v94
    %vm105 = vcmask 261120
    %v107 = vsel %vm105, %v84, 0
    %109 = vmatpush.bf16.msra.mxu0 0
    %110 = vmatpush.bf16.msra.mxu0 0
    %111 = vmatpush.bf16.msra.mxu0 0
    %112 = vmatpush.bf16.msra.mxu0 0
    %113 = vmatpush.bf16.msra.mxu0 0
    %114 = vmatpush.bf16.msra.mxu0 0
    %115 = vmatpush.bf16.msra.mxu0 %v99
    %116 = vmatpush.bf16.msra.mxu0 %v97
    %117 = vmatmul.bf16.gmra.mxu0 %v107
    %v118 = vpop.f32.mrf.mxu0
    %v119 = vadd.f32 0.0, %v118
    %v120 = vpop.f32.mrf.mxu0
    %121 = vdwg.mxu0
    %122 = vmatpush.bf16.msra.mxu0 0
    %123 = vmatpush.bf16.msra.mxu0 0
    %124 = vmatpush.bf16.msra.mxu0 0
    %125 = vmatpush.bf16.msra.mxu0 0
    %126 = vmatpush.bf16.msra.mxu0 0
    %127 = vmatpush.bf16.msra.mxu0 0
    %128 = vmatpush.bf16.msra.mxu0 %v100
    %129 = vmatpush.bf16.msra.mxu0 %v98
    %130 = vmatmul.bf16.gmra.mxu0 %v107
    %v131 = vpop.f32.mrf.mxu0
    %v132 = vadd.f32 0.0, %v131
    %v133 = vpop.f32.mrf.mxu0
    %134 = vdwg.mxu0
    %v135 = vld [vmem:[#allocation9] ss:$8 sm:$0x3]
    %s136 = scalar_lea.vmem [#allocation9], 5
    %v137 = vld [vmem:[%s136] ss:$8 sm:$0x3]
    %v138 = vrot.slane %v119, 4
    %v139 = vadd.f32 %v119, %v138
    %v140 = vrot.slane %v139, 2
    %v141 = vadd.f32 %v139, %v140
    %v142 = vrot.slane %v141, 1
    %v143 = vadd.f32 %v141, %v142
    %v144 = vrot.slane %v132, 4
    %v145 = vadd.f32 %v132, %v144
    %v146 = vrot.slane %v145, 2
    %v147 = vadd.f32 %v145, %v146
    %v148 = vrot.slane %v147, 1
    %v149 = vadd.f32 %v147, %v148
    %v150 = vmul.f32 %v143, 0.125
    %v151 = vmul.f32 %v149, 0.125
    %v152 = vmul.f32 %v119, %v119
    %v153 = vmul.f32 %v132, %v132
    %v154 = vrot.slane %v152, 4
    %v155 = vadd.f32 %v152, %v154
    %v156 = vrot.slane %v155, 2
    %v157 = vadd.f32 %v155, %v156
    %v158 = vrot.slane %v157, 1
    %v159 = vadd.f32 %v157, %v158
    %v160 = vrot.slane %v153, 4
    %v161 = vadd.f32 %v153, %v160
    %v162 = vrot.slane %v161, 2
    %v163 = vadd.f32 %v161, %v162
    %v164 = vrot.slane %v163, 1
    %v165 = vadd.f32 %v163, %v164
    %v166 = vmul.f32 %v159, 0.125
    %v167 = vmul.f32 %v165, 0.125
    %v168 = vmul.f32 %v150, %v150
    %v169 = vmul.f32 %v151, %v151
    %v170 = vsub.f32 %v166, %v168
    %v171 = vsub.f32 %v167, %v169
    %v172 = vadd.f32 %v170, 1e-05
    %v173 = vadd.f32 %v171, 1e-05
    %v174 = vrsqrt.pop %v172
    %v175 = vmul.f32 %v174, %v172
    %v176 = vmul.f32 %v175, %v174
    %v177 = vmul.f32 0.5, %v176
    %v178 = vsub.f32 1.5, %v177
    %v179 = vmul.f32 %v174, %v178
    %vm180 = vweird.f32 %v172
    %vm181 = vweird.f32 %v174
    %vm182 = vmor %vm180, %vm181
    %v183 = vsel %vm182, %v174, %v179
    %v184 = vrsqrt.pop %v173
    %v185 = vmul.f32 %v184, %v173
    %v186 = vmul.f32 %v185, %v184
    %v187 = vmul.f32 0.5, %v186
    %v188 = vsub.f32 1.5, %v187
    %v189 = vmul.f32 %v184, %v188
    %vm190 = vweird.f32 %v173
    %vm191 = vweird.f32 %v184
    %vm192 = vmor %vm190, %vm191
    %v193 = vsel %vm192, %v184, %v189
    %v196 = vrot.slane %v193, 7
    %vm197 = vcmask 1040384
    %v198 = vsel %vm197, %v183, %v196
    %v200 = vmul.f32 %v135, %v198
    %v202 = vperm.slane %v200, 0
    %v203 = vperm.slane %v200, 1
    %v206 = vmul.f32 %v150, %v202
    %v207 = vmul.f32 %v151, %v203
    %v210 = vrot.slane %v207, 7
    %v211 = vsel %vm197, %v206, %v210
    %v213 = vsub.f32 %v137, %v211
    %v214 = vmul.f32 %v119, %v202
    %v215 = vmul.f32 %v132, %v203
    %v217 = vperm.slane %v213, 0
    %v218 = vperm.slane %v213, 1
    %v221 = vadd.f32 %v214, %v217
    %v222 = vadd.f32 %v215, %v218
    %v223 = vmax.f32 %v221, 0.0
    %v224 = vmax.f32 %v222, 0.0
    %s225 = smul.u32 4, 32
    %s226 = smul.u32 %s225, 2
    %s227 = sshll.u32 %s226, 4
    %228 = dma.done [#allocation3], %s227
    %s229 = scalar_lea.vmem [#allocation2], 256
    %s230 = scalar_lea.sflag [#allocation3], 1
    // Predicated region
    $region30: #{tpu_custom_call.1} parent=1 // pred_check
      _
    $region31: #{tpu_custom_call.1} parent=1 // pred_check_branch
      %232 = sbr.rel target = $region33
    $region32: #{tpu_custom_call.1} parent=1 // pred_region
      %233 = sst [smem:[#allocation13]] [#allocation16]
      %234 = sst [smem:[#allocation14]] [#allocation15]
    $region33: #{tpu_custom_call.1} parent=1 // pred_fallthru
      _
    %236 = shalt.err (0)
    %s238 = sshll.u32 %s4, 4
    %s239 = int_to_ptr.hbm [resolvable:$true] %s238
    %s240 = sshll.u32 %s229, 4
    %s241 = int_to_ptr.vmem [resolvable:$true] %s240
    %243 = dma.hbm_to_vmem [thread:$0]  %s239, 4096, %s241, %s230
    %v244 = vld [vmem:[#allocation2] sm:$0xff]
    %v245 = vld [vmem:[#allocation2 + $0x8] sm:$0xff]
    %v246 = vld [vmem:[#allocation2 + $0x10] sm:$0xff]
    %v247 = vld [vmem:[#allocation2 + $0x18] sm:$0xff]
    %v248 = vld [vmem:[#allocation2 + $0x20] sm:$0xff]
    %v249 = vld [vmem:[#allocation2 + $0x28] sm:$0xff]
    %v250 = vld [vmem:[#allocation2 + $0x30] sm:$0xff]
    %v251 = vld [vmem:[#allocation2 + $0x38] sm:$0xff]
    %v252 = vld [vmem:[#allocation2 + $0x40] sm:$0xff]
    %v253 = vld [vmem:[#allocation2 + $0x48] sm:$0xff]
    %v254 = vld [vmem:[#allocation2 + $0x50] sm:$0xff]
    %v255 = vld [vmem:[#allocation2 + $0x58] sm:$0xff]
    %v256 = vld [vmem:[#allocation2 + $0x60] sm:$0xff]
    %v257 = vld [vmem:[#allocation2 + $0x68] sm:$0xff]
    %v258 = vld [vmem:[#allocation2 + $0x70] sm:$0xff]
    %v259 = vld [vmem:[#allocation2 + $0x78] sm:$0xff]
    %v260 = vld [vmem:[#allocation2 + $0x80] sm:$0xff]
    %v261 = vld [vmem:[#allocation2 + $0x88] sm:$0xff]
    %v262 = vld [vmem:[#allocation2 + $0x90] sm:$0xff]
    %v263 = vld [vmem:[#allocation2 + $0x98] sm:$0xff]
    %v264 = vld [vmem:[#allocation2 + $0xa0] sm:$0xff]
    %v265 = vld [vmem:[#allocation2 + $0xa8] sm:$0xff]
    %v266 = vld [vmem:[#allocation2 + $0xb0] sm:$0xff]
    %v267 = vld [vmem:[#allocation2 + $0xb8] sm:$0xff]
    %v268 = vld [vmem:[#allocation2 + $0xc0] sm:$0xff]
    %v269 = vld [vmem:[#allocation2 + $0xc8] sm:$0xff]
    %v270 = vld [vmem:[#allocation2 + $0xd0] sm:$0xff]
    %v271 = vld [vmem:[#allocation2 + $0xd8] sm:$0xff]
    %v272 = vld [vmem:[#allocation2 + $0xe0] sm:$0xff]
    %v273 = vld [vmem:[#allocation2 + $0xe8] sm:$0xff]
    %v274 = vld [vmem:[#allocation2 + $0xf0] sm:$0xff]
    %v275 = vld [vmem:[#allocation2 + $0xf8] sm:$0xff]
    %v276 = vpack.c.bf16 %v223, %v223
    %v277 = vpack.c.bf16 %v224, %v224
    %v310 = vunpack.c.l.b16 %v244
    %v311 = vunpack.c.h.b16 %v244
    %v312 = vunpack.c.l.b16 %v245
    %v313 = vunpack.c.h.b16 %v245
    %v314 = vunpack.c.l.b16 %v246
    %v315 = vunpack.c.h.b16 %v246
    %v316 = vunpack.c.l.b16 %v247
    %v317 = vunpack.c.h.b16 %v247
    %v318 = vunpack.c.l.b16 %v248
    %v319 = vunpack.c.h.b16 %v248
    %v320 = vunpack.c.l.b16 %v249
    %v321 = vunpack.c.h.b16 %v249
    %v322 = vunpack.c.l.b16 %v250
    %v323 = vunpack.c.h.b16 %v250
    %v324 = vunpack.c.l.b16 %v251
    %v325 = vunpack.c.h.b16 %v251
    %v326 = vunpack.c.l.b16 %v252
    %v327 = vunpack.c.h.b16 %v252
    %v328 = vunpack.c.l.b16 %v253
    %v329 = vunpack.c.h.b16 %v253
    %v330 = vunpack.c.l.b16 %v254
    %v331 = vunpack.c.h.b16 %v254
    %v332 = vunpack.c.l.b16 %v255
    %v333 = vunpack.c.h.b16 %v255
    %v334 = vunpack.c.l.b16 %v256
    %v335 = vunpack.c.h.b16 %v256
    %v336 = vunpack.c.l.b16 %v257
    %v337 = vunpack.c.h.b16 %v257
    %v338 = vunpack.c.l.b16 %v258
    %v339 = vunpack.c.h.b16 %v258
    %v340 = vunpack.c.l.b16 %v259
    %v341 = vunpack.c.h.b16 %v259
    %v342 = vunpack.c.l.b16 %v260
    %v343 = vunpack.c.h.b16 %v260
    %v344 = vunpack.c.l.b16 %v261
    %v345 = vunpack.c.h.b16 %v261
    %v346 = vunpack.c.l.b16 %v262
    %v347 = vunpack.c.h.b16 %v262
    %v348 = vunpack.c.l.b16 %v263
    %v349 = vunpack.c.h.b16 %v263
    %v350 = vunpack.c.l.b16 %v264
    %v351 = vunpack.c.h.b16 %v264
    %v352 = vunpack.c.l.b16 %v265
    %v353 = vunpack.c.h.b16 %v265
    %v354 = vunpack.c.l.b16 %v266
    %v355 = vunpack.c.h.b16 %v266
    %v356 = vunpack.c.l.b16 %v267
    %v357 = vunpack.c.h.b16 %v267
    %v358 = vunpack.c.l.b16 %v268
    %v359 = vunpack.c.h.b16 %v268
    %v360 = vunpack.c.l.b16 %v269
    %v361 = vunpack.c.h.b16 %v269
    %v362 = vunpack.c.l.b16 %v270
    %v363 = vunpack.c.h.b16 %v270
    %v364 = vunpack.c.l.b16 %v271
    %v365 = vunpack.c.h.b16 %v271
    %v366 = vunpack.c.l.b16 %v272
    %v367 = vunpack.c.h.b16 %v272
    %v368 = vunpack.c.l.b16 %v273
    %v369 = vunpack.c.h.b16 %v273
    %v370 = vunpack.c.l.b16 %v274
    %v371 = vunpack.c.h.b16 %v274
    %v372 = vunpack.c.l.b16 %v275
    %v373 = vunpack.c.h.b16 %v275
    %v374 = vpack.c.b16 %v312, %v310
    %v375 = vpack.c.b16 %v313, %v311
    %v376 = vpack.c.b16 %v316, %v314
    %v377 = vpack.c.b16 %v317, %v315
    %v378 = vpack.c.b16 %v320, %v318
    %v379 = vpack.c.b16 %v321, %v319
    %v380 = vpack.c.b16 %v324, %v322
    %v381 = vpack.c.b16 %v325, %v323
    %v382 = vpack.c.b16 %v328, %v326
    %v383 = vpack.c.b16 %v329, %v327
    %v384 = vpack.c.b16 %v332, %v330
    %v385 = vpack.c.b16 %v333, %v331
    %v386 = vpack.c.b16 %v336, %v334
    %v387 = vpack.c.b16 %v337, %v335
    %v388 = vpack.c.b16 %v340, %v338
    %v389 = vpack.c.b16 %v341, %v339
    %v390 = vpack.c.b16 %v344, %v342
    %v391 = vpack.c.b16 %v345, %v343
    %v392 = vpack.c.b16 %v348, %v346
    %v393 = vpack.c.b16 %v349, %v347
    %v394 = vpack.c.b16 %v352, %v350
    %v395 = vpack.c.b16 %v353, %v351
    %v396 = vpack.c.b16 %v356, %v354
    %v397 = vpack.c.b16 %v357, %v355
    %v398 = vpack.c.b16 %v360, %v358
    %v399 = vpack.c.b16 %v361, %v359
    %v400 = vpack.c.b16 %v364, %v362
    %v401 = vpack.c.b16 %v365, %v363
    %v402 = vpack.c.b16 %v368, %v366
    %v403 = vpack.c.b16 %v369, %v367
    %v404 = vpack.c.b16 %v372, %v370
    %v405 = vpack.c.b16 %v373, %v371
    %438 = vmatpush.bf16.msra.mxu0 %v388
    %439 = vmatpush.bf16.msra.mxu0 %v386
    %440 = vmatpush.bf16.msra.mxu0 %v384
    %441 = vmatpush.bf16.msra.mxu0 %v382
    %442 = vmatpush.bf16.msra.mxu0 %v380
    %443 = vmatpush.bf16.msra.mxu0 %v378
    %444 = vmatpush.bf16.msra.mxu0 %v376
    %445 = vmatpush.bf16.msra.mxu0 %v374
    %446 = vmatmul.bf16.gmra.mxu0 %v276
    %v447 = vpop.f32.mrf.mxu0
    %v448 = vadd.f32 0.0, %v447
    %v449 = vpop.f32.mrf.mxu0
    %450 = vdwg.mxu0
    %451 = vmatpush.bf16.msra.mxu0 %v404
    %452 = vmatpush.bf16.msra.mxu0 %v402
    %453 = vmatpush.bf16.msra.mxu0 %v400
    %454 = vmatpush.bf16.msra.mxu0 %v398
    %455 = vmatpush.bf16.msra.mxu0 %v396
    %456 = vmatpush.bf16.msra.mxu0 %v394
    %457 = vmatpush.bf16.msra.mxu0 %v392
    %458 = vmatpush.bf16.msra.mxu0 %v390
    %459 = vmatmul.bf16.gmra.mxu0 %v277
    %v460 = vpop.f32.mrf.mxu0
    %v461 = vadd.f32 %v448, %v460
    %v462 = vpop.f32.mrf.mxu0
    %463 = vdwg.mxu0
    %464 = vmatpush.bf16.msra.mxu0 %v389
    %465 = vmatpush.bf16.msra.mxu0 %v387
    %466 = vmatpush.bf16.msra.mxu0 %v385
    %467 = vmatpush.bf16.msra.mxu0 %v383
    %468 = vmatpush.bf16.msra.mxu0 %v381
    %469 = vmatpush.bf16.msra.mxu0 %v379
    %470 = vmatpush.bf16.msra.mxu0 %v377
    %471 = vmatpush.bf16.msra.mxu0 %v375
    %472 = vmatmul.bf16.gmra.mxu0 %v276
    %v473 = vpop.f32.mrf.mxu0
    %v474 = vadd.f32 0.0, %v473
    %v475 = vpop.f32.mrf.mxu0
    %476 = vdwg.mxu0
    %477 = vmatpush.bf16.msra.mxu0 %v405
    %478 = vmatpush.bf16.msra.mxu0 %v403
    %479 = vmatpush.bf16.msra.mxu0 %v401
    %480 = vmatpush.bf16.msra.mxu0 %v399
    %481 = vmatpush.bf16.msra.mxu0 %v397
    %482 = vmatpush.bf16.msra.mxu0 %v395
    %483 = vmatpush.bf16.msra.mxu0 %v393
    %484 = vmatpush.bf16.msra.mxu0 %v391
    %485 = vmatmul.bf16.gmra.mxu0 %v277
    %v486 = vpop.f32.mrf.mxu0
    %v487 = vadd.f32 %v474, %v486
    %v488 = vpop.f32.mrf.mxu0
    %489 = vdwg.mxu0
    %s490 = scalar_lea.vmem [#allocation9], 1
    %v491 = vld [vmem:[%s490] ss:$8 sm:$0x3]
    %s492 = scalar_lea.vmem [#allocation9], 6
    %v493 = vld [vmem:[%s492] ss:$8 sm:$0x3]
    %v494 = vrot.slane %v461, 4
    %v495 = vadd.f32 %v461, %v494
    %v496 = vrot.slane %v495, 2
    %v497 = vadd.f32 %v495, %v496
    %v498 = vrot.slane %v497, 1
    %v499 = vadd.f32 %v497, %v498
    %v500 = vrot.slane %v487, 4
    %v501 = vadd.f32 %v487, %v500
    %v502 = vrot.slane %v501, 2
    %v503 = vadd.f32 %v501, %v502
    %v504 = vrot.slane %v503, 1
    %v505 = vadd.f32 %v503, %v504
    %v506 = vmul.f32 %v499, 0.125
    %v507 = vmul.f32 %v505, 0.125
    %v508 = vmul.f32 %v461, %v461
    %v509 = vmul.f32 %v487, %v487
    %v510 = vrot.slane %v508, 4
    %v511 = vadd.f32 %v508, %v510
    %v512 = vrot.slane %v511, 2
    %v513 = vadd.f32 %v511, %v512
    %v514 = vrot.slane %v513, 1
    %v515 = vadd.f32 %v513, %v514
    %v516 = vrot.slane %v509, 4
    %v517 = vadd.f32 %v509, %v516
    %v518 = vrot.slane %v517, 2
    %v519 = vadd.f32 %v517, %v518
    %v520 = vrot.slane %v519, 1
    %v521 = vadd.f32 %v519, %v520
    %v522 = vmul.f32 %v515, 0.125
    %v523 = vmul.f32 %v521, 0.125
    %v524 = vmul.f32 %v506, %v506
    %v525 = vmul.f32 %v507, %v507
    %v526 = vsub.f32 %v522, %v524
    %v527 = vsub.f32 %v523, %v525
    %v528 = vadd.f32 %v526, 1e-05
    %v529 = vadd.f32 %v527, 1e-05
    %v530 = vrsqrt.pop %v528
    %v531 = vmul.f32 %v530, %v528
    %v532 = vmul.f32 %v531, %v530
    %v533 = vmul.f32 0.5, %v532
    %v534 = vsub.f32 1.5, %v533
    %v535 = vmul.f32 %v530, %v534
    %vm536 = vweird.f32 %v528
    %vm537 = vweird.f32 %v530
    %vm538 = vmor %vm536, %vm537
    %v539 = vsel %vm538, %v530, %v535
    %v540 = vrsqrt.pop %v529
    %v541 = vmul.f32 %v540, %v529
    %v542 = vmul.f32 %v541, %v540
    %v543 = vmul.f32 0.5, %v542
    %v544 = vsub.f32 1.5, %v543
    %v545 = vmul.f32 %v540, %v544
    %vm546 = vweird.f32 %v529
    %vm547 = vweird.f32 %v540
    %vm548 = vmor %vm546, %vm547
    %v549 = vsel %vm548, %v540, %v545
    %v552 = vrot.slane %v549, 7
    %v553 = vsel %vm197, %v539, %v552
    %v555 = vmul.f32 %v491, %v553
    %v557 = vperm.slane %v555, 0
    %v558 = vperm.slane %v555, 1
    %v561 = vmul.f32 %v506, %v557
    %v562 = vmul.f32 %v507, %v558
    %v565 = vrot.slane %v562, 7
    %v566 = vsel %vm197, %v561, %v565
    %v568 = vsub.f32 %v493, %v566
    %v569 = vmul.f32 %v461, %v557
    %v570 = vmul.f32 %v487, %v558
    %v572 = vperm.slane %v568, 0
    %v573 = vperm.slane %v568, 1
    %v576 = vadd.f32 %v569, %v572
    %v577 = vadd.f32 %v570, %v573
    %v578 = vmax.f32 %v576, 0.0
    %v579 = vmax.f32 %v577, 0.0
    %s580 = sshll.u32 %s226, 4
    %581 = dma.done %s230, %s580
    // Predicated region
    $region34: #{tpu_custom_call.1} parent=1 // pred_check
      _
    $region35: #{tpu_custom_call.1} parent=1 // pred_check_branch
      %583 = sbr.rel target = $region37
    $region36: #{tpu_custom_call.1} parent=1 // pred_region
      %584 = sst [smem:[#allocation13]] [#allocation18]
      %585 = sst [smem:[#allocation14]] [#allocation17]
    $region37: #{tpu_custom_call.1} parent=1 // pred_fallthru
      _
    %587 = shalt.err (0)
    %s589 = sshll.u32 %s5, 4
    %s590 = int_to_ptr.hbm [resolvable:$true] %s589
    %s591 = sshll.u32 [#allocation2], 4
    %s592 = int_to_ptr.vmem [resolvable:$true] %s591
    %594 = dma.hbm_to_vmem [thread:$0]  %s590, 4096, %s592, [#allocation3]
    %v595 = vld [vmem:[%s229] sm:$0xff]
    %v596 = vld [vmem:[%s229 + $0x8] sm:$0xff]
    %v597 = vld [vmem:[%s229 + $0x10] sm:$0xff]
    %v598 = vld [vmem:[%s229 + $0x18] sm:$0xff]
    %v599 = vld [vmem:[%s229 + $0x20] sm:$0xff]
    %v600 = vld [vmem:[%s229 + $0x28] sm:$0xff]
    %v601 = vld [vmem:[%s229 + $0x30] sm:$0xff]
    %v602 = vld [vmem:[%s229 + $0x38] sm:$0xff]
    %v603 = vld [vmem:[%s229 + $0x40] sm:$0xff]
    %v604 = vld [vmem:[%s229 + $0x48] sm:$0xff]
    %v605 = vld [vmem:[%s229 + $0x50] sm:$0xff]
    %v606 = vld [vmem:[%s229 + $0x58] sm:$0xff]
    %v607 = vld [vmem:[%s229 + $0x60] sm:$0xff]
    %v608 = vld [vmem:[%s229 + $0x68] sm:$0xff]
    %v609 = vld [vmem:[%s229 + $0x70] sm:$0xff]
    %v610 = vld [vmem:[%s229 + $0x78] sm:$0xff]
    %v611 = vld [vmem:[%s229 + $0x80] sm:$0xff]
    %v612 = vld [vmem:[%s229 + $0x88] sm:$0xff]
    %v613 = vld [vmem:[%s229 + $0x90] sm:$0xff]
    %v614 = vld [vmem:[%s229 + $0x98] sm:$0xff]
    %v615 = vld [vmem:[%s229 + $0xa0] sm:$0xff]
    %v616 = vld [vmem:[%s229 + $0xa8] sm:$0xff]
    %v617 = vld [vmem:[%s229 + $0xb0] sm:$0xff]
    %v618 = vld [vmem:[%s229 + $0xb8] sm:$0xff]
    %v619 = vld [vmem:[%s229 + $0xc0] sm:$0xff]
    %v620 = vld [vmem:[%s229 + $0xc8] sm:$0xff]
    %v621 = vld [vmem:[%s229 + $0xd0] sm:$0xff]
    %v622 = vld [vmem:[%s229 + $0xd8] sm:$0xff]
    %v623 = vld [vmem:[%s229 + $0xe0] sm:$0xff]
    %v624 = vld [vmem:[%s229 + $0xe8] sm:$0xff]
    %v625 = vld [vmem:[%s229 + $0xf0] sm:$0xff]
    %v626 = vld [vmem:[%s229 + $0xf8] sm:$0xff]
    %v627 = vpack.c.bf16 %v578, %v578
    %v628 = vpack.c.bf16 %v579, %v579
    %v661 = vunpack.c.l.b16 %v595
    %v662 = vunpack.c.h.b16 %v595
    %v663 = vunpack.c.l.b16 %v596
    %v664 = vunpack.c.h.b16 %v596
    %v665 = vunpack.c.l.b16 %v597
    %v666 = vunpack.c.h.b16 %v597
    %v667 = vunpack.c.l.b16 %v598
    %v668 = vunpack.c.h.b16 %v598
    %v669 = vunpack.c.l.b16 %v599
    %v670 = vunpack.c.h.b16 %v599
    %v671 = vunpack.c.l.b16 %v600
    %v672 = vunpack.c.h.b16 %v600
    %v673 = vunpack.c.l.b16 %v601
    %v674 = vunpack.c.h.b16 %v601
    %v675 = vunpack.c.l.b16 %v602
    %v676 = vunpack.c.h.b16 %v602
    %v677 = vunpack.c.l.b16 %v603
    %v678 = vunpack.c.h.b16 %v603
    %v679 = vunpack.c.l.b16 %v604
    %v680 = vunpack.c.h.b16 %v604
    %v681 = vunpack.c.l.b16 %v605
    %v682 = vunpack.c.h.b16 %v605
    %v683 = vunpack.c.l.b16 %v606
    %v684 = vunpack.c.h.b16 %v606
    %v685 = vunpack.c.l.b16 %v607
    %v686 = vunpack.c.h.b16 %v607
    %v687 = vunpack.c.l.b16 %v608
    %v688 = vunpack.c.h.b16 %v608
    %v689 = vunpack.c.l.b16 %v609
    %v690 = vunpack.c.h.b16 %v609
    %v691 = vunpack.c.l.b16 %v610
    %v692 = vunpack.c.h.b16 %v610
    %v693 = vunpack.c.l.b16 %v611
    %v694 = vunpack.c.h.b16 %v611
    %v695 = vunpack.c.l.b16 %v612
    %v696 = vunpack.c.h.b16 %v612
    %v697 = vunpack.c.l.b16 %v613
    %v698 = vunpack.c.h.b16 %v613
    %v699 = vunpack.c.l.b16 %v614
    %v700 = vunpack.c.h.b16 %v614
    %v701 = vunpack.c.l.b16 %v615
    %v702 = vunpack.c.h.b16 %v615
    %v703 = vunpack.c.l.b16 %v616
    %v704 = vunpack.c.h.b16 %v616
    %v705 = vunpack.c.l.b16 %v617
    %v706 = vunpack.c.h.b16 %v617
    %v707 = vunpack.c.l.b16 %v618
    %v708 = vunpack.c.h.b16 %v618
    %v709 = vunpack.c.l.b16 %v619
    %v710 = vunpack.c.h.b16 %v619
    %v711 = vunpack.c.l.b16 %v620
    %v712 = vunpack.c.h.b16 %v620
    %v713 = vunpack.c.l.b16 %v621
    %v714 = vunpack.c.h.b16 %v621
    %v715 = vunpack.c.l.b16 %v622
    %v716 = vunpack.c.h.b16 %v622
    %v717 = vunpack.c.l.b16 %v623
    %v718 = vunpack.c.h.b16 %v623
    %v719 = vunpack.c.l.b16 %v624
    %v720 = vunpack.c.h.b16 %v624
    %v721 = vunpack.c.l.b16 %v625
    %v722 = vunpack.c.h.b16 %v625
    %v723 = vunpack.c.l.b16 %v626
    %v724 = vunpack.c.h.b16 %v626
    %v725 = vpack.c.b16 %v663, %v661
    %v726 = vpack.c.b16 %v664, %v662
    %v727 = vpack.c.b16 %v667, %v665
    %v728 = vpack.c.b16 %v668, %v666
    %v729 = vpack.c.b16 %v671, %v669
    %v730 = vpack.c.b16 %v672, %v670
    %v731 = vpack.c.b16 %v675, %v673
    %v732 = vpack.c.b16 %v676, %v674
    %v733 = vpack.c.b16 %v679, %v677
    %v734 = vpack.c.b16 %v680, %v678
    %v735 = vpack.c.b16 %v683, %v681
    %v736 = vpack.c.b16 %v684, %v682
    %v737 = vpack.c.b16 %v687, %v685
    %v738 = vpack.c.b16 %v688, %v686
    %v739 = vpack.c.b16 %v691, %v689
    %v740 = vpack.c.b16 %v692, %v690
    %v741 = vpack.c.b16 %v695, %v693
    %v742 = vpack.c.b16 %v696, %v694
    %v743 = vpack.c.b16 %v699, %v697
    %v744 = vpack.c.b16 %v700, %v698
    %v745 = vpack.c.b16 %v703, %v701
    %v746 = vpack.c.b16 %v704, %v702
    %v747 = vpack.c.b16 %v707, %v705
    %v748 = vpack.c.b16 %v708, %v706
    %v749 = vpack.c.b16 %v711, %v709
    %v750 = vpack.c.b16 %v712, %v710
    %v751 = vpack.c.b16 %v715, %v713
    %v752 = vpack.c.b16 %v716, %v714
    %v753 = vpack.c.b16 %v719, %v717
    %v754 = vpack.c.b16 %v720, %v718
    %v755 = vpack.c.b16 %v723, %v721
    %v756 = vpack.c.b16 %v724, %v722
    %789 = vmatpush.bf16.msra.mxu0 %v739
    %790 = vmatpush.bf16.msra.mxu0 %v737
    %791 = vmatpush.bf16.msra.mxu0 %v735
    %792 = vmatpush.bf16.msra.mxu0 %v733
    %793 = vmatpush.bf16.msra.mxu0 %v731
    %794 = vmatpush.bf16.msra.mxu0 %v729
    %795 = vmatpush.bf16.msra.mxu0 %v727
    %796 = vmatpush.bf16.msra.mxu0 %v725
    %797 = vmatmul.bf16.gmra.mxu0 %v627
    %v798 = vpop.f32.mrf.mxu0
    %v799 = vadd.f32 0.0, %v798
    %v800 = vpop.f32.mrf.mxu0
    %801 = vdwg.mxu0
    %802 = vmatpush.bf16.msra.mxu0 %v755
    %803 = vmatpush.bf16.msra.mxu0 %v753
    %804 = vmatpush.bf16.msra.mxu0 %v751
    %805 = vmatpush.bf16.msra.mxu0 %v749
    %806 = vmatpush.bf16.msra.mxu0 %v747
    %807 = vmatpush.bf16.msra.mxu0 %v745
    %808 = vmatpush.bf16.msra.mxu0 %v743
    %809 = vmatpush.bf16.msra.mxu0 %v741
    %810 = vmatmul.bf16.gmra.mxu0 %v628
    %v811 = vpop.f32.mrf.mxu0
    %v812 = vadd.f32 %v799, %v811
    %v813 = vpop.f32.mrf.mxu0
    %814 = vdwg.mxu0
    %815 = vmatpush.bf16.msra.mxu0 %v740
    %816 = vmatpush.bf16.msra.mxu0 %v738
    %817 = vmatpush.bf16.msra.mxu0 %v736
    %818 = vmatpush.bf16.msra.mxu0 %v734
    %819 = vmatpush.bf16.msra.mxu0 %v732
    %820 = vmatpush.bf16.msra.mxu0 %v730
    %821 = vmatpush.bf16.msra.mxu0 %v728
    %822 = vmatpush.bf16.msra.mxu0 %v726
    %823 = vmatmul.bf16.gmra.mxu0 %v627
    %v824 = vpop.f32.mrf.mxu0
    %v825 = vadd.f32 0.0, %v824
    %v826 = vpop.f32.mrf.mxu0
    %827 = vdwg.mxu0
    %828 = vmatpush.bf16.msra.mxu0 %v756
    %829 = vmatpush.bf16.msra.mxu0 %v754
    %830 = vmatpush.bf16.msra.mxu0 %v752
    %831 = vmatpush.bf16.msra.mxu0 %v750
    %832 = vmatpush.bf16.msra.mxu0 %v748
    %833 = vmatpush.bf16.msra.mxu0 %v746
    %834 = vmatpush.bf16.msra.mxu0 %v744
    %835 = vmatpush.bf16.msra.mxu0 %v742
    %836 = vmatmul.bf16.gmra.mxu0 %v628
    %v837 = vpop.f32.mrf.mxu0
    %v838 = vadd.f32 %v825, %v837
    %v839 = vpop.f32.mrf.mxu0
    %840 = vdwg.mxu0
    %s841 = scalar_lea.vmem [#allocation9], 2
    %v842 = vld [vmem:[%s841] ss:$8 sm:$0x3]
    %s843 = scalar_lea.vmem [#allocation9], 7
    %v844 = vld [vmem:[%s843] ss:$8 sm:$0x3]
    %v845 = vrot.slane %v812, 4
    %v846 = vadd.f32 %v812, %v845
    %v847 = vrot.slane %v846, 2
    %v848 = vadd.f32 %v846, %v847
    %v849 = vrot.slane %v848, 1
    %v850 = vadd.f32 %v848, %v849
    %v851 = vrot.slane %v838, 4
    %v852 = vadd.f32 %v838, %v851
    %v853 = vrot.slane %v852, 2
    %v854 = vadd.f32 %v852, %v853
    %v855 = vrot.slane %v854, 1
    %v856 = vadd.f32 %v854, %v855
    %v857 = vmul.f32 %v850, 0.125
    %v858 = vmul.f32 %v856, 0.125
    %v859 = vmul.f32 %v812, %v812
    %v860 = vmul.f32 %v838, %v838
    %v861 = vrot.slane %v859, 4
    %v862 = vadd.f32 %v859, %v861
    %v863 = vrot.slane %v862, 2
    %v864 = vadd.f32 %v862, %v863
    %v865 = vrot.slane %v864, 1
    %v866 = vadd.f32 %v864, %v865
    %v867 = vrot.slane %v860, 4
    %v868 = vadd.f32 %v860, %v867
    %v869 = vrot.slane %v868, 2
    %v870 = vadd.f32 %v868, %v869
    %v871 = vrot.slane %v870, 1
    %v872 = vadd.f32 %v870, %v871
    %v873 = vmul.f32 %v866, 0.125
    %v874 = vmul.f32 %v872, 0.125
    %v875 = vmul.f32 %v857, %v857
    %v876 = vmul.f32 %v858, %v858
    %v877 = vsub.f32 %v873, %v875
    %v878 = vsub.f32 %v874, %v876
    %v879 = vadd.f32 %v877, 1e-05
    %v880 = vadd.f32 %v878, 1e-05
    %v881 = vrsqrt.pop %v879
    %v882 = vmul.f32 %v881, %v879
    %v883 = vmul.f32 %v882, %v881
    %v884 = vmul.f32 0.5, %v883
    %v885 = vsub.f32 1.5, %v884
    %v886 = vmul.f32 %v881, %v885
    %vm887 = vweird.f32 %v879
    %vm888 = vweird.f32 %v881
    %vm889 = vmor %vm887, %vm888
    %v890 = vsel %vm889, %v881, %v886
    %v891 = vrsqrt.pop %v880
    %v892 = vmul.f32 %v891, %v880
    %v893 = vmul.f32 %v892, %v891
    %v894 = vmul.f32 0.5, %v893
    %v895 = vsub.f32 1.5, %v894
    %v896 = vmul.f32 %v891, %v895
    %vm897 = vweird.f32 %v880
    %vm898 = vweird.f32 %v891
    %vm899 = vmor %vm897, %vm898
    %v900 = vsel %vm899, %v891, %v896
    %v903 = vrot.slane %v900, 7
    %v904 = vsel %vm197, %v890, %v903
    %v906 = vmul.f32 %v842, %v904
    %v908 = vperm.slane %v906, 0
    %v909 = vperm.slane %v906, 1
    %v912 = vmul.f32 %v857, %v908
    %v913 = vmul.f32 %v858, %v909
    %v916 = vrot.slane %v913, 7
    %v917 = vsel %vm197, %v912, %v916
    %v919 = vsub.f32 %v844, %v917
    %v920 = vmul.f32 %v812, %v908
    %v921 = vmul.f32 %v838, %v909
    %v923 = vperm.slane %v919, 0
    %v924 = vperm.slane %v919, 1
    %v927 = vadd.f32 %v920, %v923
    %v928 = vadd.f32 %v921, %v924
    %v929 = vmax.f32 %v927, 0.0
    %v930 = vmax.f32 %v928, 0.0
    %s931 = sshll.u32 %s226, 4
    %932 = dma.done [#allocation3], %s931
    // Predicated region
    $region38: #{tpu_custom_call.1} parent=1 // pred_check
      _
    $region39: #{tpu_custom_call.1} parent=1 // pred_check_branch
      %934 = sbr.rel target = $region41
    $region40: #{tpu_custom_call.1} parent=1 // pred_region
      %935 = sst [smem:[#allocation13]] [#allocation20]
      %936 = sst [smem:[#allocation14]] [#allocation19]
    $region41: #{tpu_custom_call.1} parent=1 // pred_fallthru
      _
    %938 = shalt.err (0)
    %s940 = sshll.u32 %s6, 4
    %s941 = int_to_ptr.hbm [resolvable:$true] %s940
    %s942 = sshll.u32 %s229, 4
    %s943 = int_to_ptr.vmem [resolvable:$true] %s942
    %945 = dma.hbm_to_vmem [thread:$0]  %s941, 4096, %s943, %s230
    %v946 = vld [vmem:[#allocation2] sm:$0xff]
    %v947 = vld [vmem:[#allocation2 + $0x8] sm:$0xff]
    %v948 = vld [vmem:[#allocation2 + $0x10] sm:$0xff]
    %v949 = vld [vmem:[#allocation2 + $0x18] sm:$0xff]
    %v950 = vld [vmem:[#allocation2 + $0x20] sm:$0xff]
    %v951 = vld [vmem:[#allocation2 + $0x28] sm:$0xff]
    %v952 = vld [vmem:[#allocation2 + $0x30] sm:$0xff]
    %v953 = vld [vmem:[#allocation2 + $0x38] sm:$0xff]
    %v954 = vld [vmem:[#allocation2 + $0x40] sm:$0xff]
    %v955 = vld [vmem:[#allocation2 + $0x48] sm:$0xff]
    %v956 = vld [vmem:[#allocation2 + $0x50] sm:$0xff]
    %v957 = vld [vmem:[#allocation2 + $0x58] sm:$0xff]
    %v958 = vld [vmem:[#allocation2 + $0x60] sm:$0xff]
    %v959 = vld [vmem:[#allocation2 + $0x68] sm:$0xff]
    %v960 = vld [vmem:[#allocation2 + $0x70] sm:$0xff]
    %v961 = vld [vmem:[#allocation2 + $0x78] sm:$0xff]
    %v962 = vld [vmem:[#allocation2 + $0x80] sm:$0xff]
    %v963 = vld [vmem:[#allocation2 + $0x88] sm:$0xff]
    %v964 = vld [vmem:[#allocation2 + $0x90] sm:$0xff]
    %v965 = vld [vmem:[#allocation2 + $0x98] sm:$0xff]
    %v966 = vld [vmem:[#allocation2 + $0xa0] sm:$0xff]
    %v967 = vld [vmem:[#allocation2 + $0xa8] sm:$0xff]
    %v968 = vld [vmem:[#allocation2 + $0xb0] sm:$0xff]
    %v969 = vld [vmem:[#allocation2 + $0xb8] sm:$0xff]
    %v970 = vld [vmem:[#allocation2 + $0xc0] sm:$0xff]
    %v971 = vld [vmem:[#allocation2 + $0xc8] sm:$0xff]
    %v972 = vld [vmem:[#allocation2 + $0xd0] sm:$0xff]
    %v973 = vld [vmem:[#allocation2 + $0xd8] sm:$0xff]
    %v974 = vld [vmem:[#allocation2 + $0xe0] sm:$0xff]
    %v975 = vld [vmem:[#allocation2 + $0xe8] sm:$0xff]
    %v976 = vld [vmem:[#allocation2 + $0xf0] sm:$0xff]
    %v977 = vld [vmem:[#allocation2 + $0xf8] sm:$0xff]
    %v978 = vpack.c.bf16 %v929, %v929
    %v979 = vpack.c.bf16 %v930, %v930
    %v1012 = vunpack.c.l.b16 %v946
    %v1013 = vunpack.c.h.b16 %v946
    %v1014 = vunpack.c.l.b16 %v947
    %v1015 = vunpack.c.h.b16 %v947
    %v1016 = vunpack.c.l.b16 %v948
    %v1017 = vunpack.c.h.b16 %v948
    %v1018 = vunpack.c.l.b16 %v949
    %v1019 = vunpack.c.h.b16 %v949
    %v1020 = vunpack.c.l.b16 %v950
    %v1021 = vunpack.c.h.b16 %v950
    %v1022 = vunpack.c.l.b16 %v951
    %v1023 = vunpack.c.h.b16 %v951
    %v1024 = vunpack.c.l.b16 %v952
    %v1025 = vunpack.c.h.b16 %v952
    %v1026 = vunpack.c.l.b16 %v953
    %v1027 = vunpack.c.h.b16 %v953
    %v1028 = vunpack.c.l.b16 %v954
    %v1029 = vunpack.c.h.b16 %v954
    %v1030 = vunpack.c.l.b16 %v955
    %v1031 = vunpack.c.h.b16 %v955
    %v1032 = vunpack.c.l.b16 %v956
    %v1033 = vunpack.c.h.b16 %v956
    %v1034 = vunpack.c.l.b16 %v957
    %v1035 = vunpack.c.h.b16 %v957
    %v1036 = vunpack.c.l.b16 %v958
    %v1037 = vunpack.c.h.b16 %v958
    %v1038 = vunpack.c.l.b16 %v959
    %v1039 = vunpack.c.h.b16 %v959
    %v1040 = vunpack.c.l.b16 %v960
    %v1041 = vunpack.c.h.b16 %v960
    %v1042 = vunpack.c.l.b16 %v961
    %v1043 = vunpack.c.h.b16 %v961
    %v1044 = vunpack.c.l.b16 %v962
    %v1045 = vunpack.c.h.b16 %v962
    %v1046 = vunpack.c.l.b16 %v963
    %v1047 = vunpack.c.h.b16 %v963
    %v1048 = vunpack.c.l.b16 %v964
    %v1049 = vunpack.c.h.b16 %v964
    %v1050 = vunpack.c.l.b16 %v965
    %v1051 = vunpack.c.h.b16 %v965
    %v1052 = vunpack.c.l.b16 %v966
    %v1053 = vunpack.c.h.b16 %v966
    %v1054 = vunpack.c.l.b16 %v967
    %v1055 = vunpack.c.h.b16 %v967
    %v1056 = vunpack.c.l.b16 %v968
    %v1057 = vunpack.c.h.b16 %v968
    %v1058 = vunpack.c.l.b16 %v969
    %v1059 = vunpack.c.h.b16 %v969
    %v1060 = vunpack.c.l.b16 %v970
    %v1061 = vunpack.c.h.b16 %v970
    %v1062 = vunpack.c.l.b16 %v971
    %v1063 = vunpack.c.h.b16 %v971
    %v1064 = vunpack.c.l.b16 %v972
    %v1065 = vunpack.c.h.b16 %v972
    %v1066 = vunpack.c.l.b16 %v973
    %v1067 = vunpack.c.h.b16 %v973
    %v1068 = vunpack.c.l.b16 %v974
    %v1069 = vunpack.c.h.b16 %v974
    %v1070 = vunpack.c.l.b16 %v975
    %v1071 = vunpack.c.h.b16 %v975
    %v1072 = vunpack.c.l.b16 %v976
    %v1073 = vunpack.c.h.b16 %v976
    %v1074 = vunpack.c.l.b16 %v977
    %v1075 = vunpack.c.h.b16 %v977
    %v1076 = vpack.c.b16 %v1014, %v1012
    %v1077 = vpack.c.b16 %v1015, %v1013
    %v1078 = vpack.c.b16 %v1018, %v1016
    %v1079 = vpack.c.b16 %v1019, %v1017
    %v1080 = vpack.c.b16 %v1022, %v1020
    %v1081 = vpack.c.b16 %v1023, %v1021
    %v1082 = vpack.c.b16 %v1026, %v1024
    %v1083 = vpack.c.b16 %v1027, %v1025
    %v1084 = vpack.c.b16 %v1030, %v1028
    %v1085 = vpack.c.b16 %v1031, %v1029
    %v1086 = vpack.c.b16 %v1034, %v1032
    %v1087 = vpack.c.b16 %v1035, %v1033
    %v1088 = vpack.c.b16 %v1038, %v1036
    %v1089 = vpack.c.b16 %v1039, %v1037
    %v1090 = vpack.c.b16 %v1042, %v1040
    %v1091 = vpack.c.b16 %v1043, %v1041
    %v1092 = vpack.c.b16 %v1046, %v1044
    %v1093 = vpack.c.b16 %v1047, %v1045
    %v1094 = vpack.c.b16 %v1050, %v1048
    %v1095 = vpack.c.b16 %v1051, %v1049
    %v1096 = vpack.c.b16 %v1054, %v1052
    %v1097 = vpack.c.b16 %v1055, %v1053
    %v1098 = vpack.c.b16 %v1058, %v1056
    %v1099 = vpack.c.b16 %v1059, %v1057
    %v1100 = vpack.c.b16 %v1062, %v1060
    %v1101 = vpack.c.b16 %v1063, %v1061
    %v1102 = vpack.c.b16 %v1066, %v1064
    %v1103 = vpack.c.b16 %v1067, %v1065
    %v1104 = vpack.c.b16 %v1070, %v1068
    %v1105 = vpack.c.b16 %v1071, %v1069
    %v1106 = vpack.c.b16 %v1074, %v1072
    %v1107 = vpack.c.b16 %v1075, %v1073
    %1140 = vmatpush.bf16.msra.mxu0 %v1090
    %1141 = vmatpush.bf16.msra.mxu0 %v1088
    %1142 = vmatpush.bf16.msra.mxu0 %v1086
    %1143 = vmatpush.bf16.msra.mxu0 %v1084
    %1144 = vmatpush.bf16.msra.mxu0 %v1082
    %1145 = vmatpush.bf16.msra.mxu0 %v1080
    %1146 = vmatpush.bf16.msra.mxu0 %v1078
    %1147 = vmatpush.bf16.msra.mxu0 %v1076
    %1148 = vmatmul.bf16.gmra.mxu0 %v978
    %v1149 = vpop.f32.mrf.mxu0
    %v1150 = vadd.f32 0.0, %v1149
    %v1151 = vpop.f32.mrf.mxu0
    %1152 = vdwg.mxu0
    %1153 = vmatpush.bf16.msra.mxu0 %v1106
    %1154 = vmatpush.bf16.msra.mxu0 %v1104
    %1155 = vmatpush.bf16.msra.mxu0 %v1102
    %1156 = vmatpush.bf16.msra.mxu0 %v1100
    %1157 = vmatpush.bf16.msra.mxu0 %v1098
    %1158 = vmatpush.bf16.msra.mxu0 %v1096
    %1159 = vmatpush.bf16.msra.mxu0 %v1094
    %1160 = vmatpush.bf16.msra.mxu0 %v1092
    %1161 = vmatmul.bf16.gmra.mxu0 %v979
    %v1162 = vpop.f32.mrf.mxu0
    %v1163 = vadd.f32 %v1150, %v1162
    %v1164 = vpop.f32.mrf.mxu0
    %1165 = vdwg.mxu0
    %1166 = vmatpush.bf16.msra.mxu0 %v1091
    %1167 = vmatpush.bf16.msra.mxu0 %v1089
    %1168 = vmatpush.bf16.msra.mxu0 %v1087
    %1169 = vmatpush.bf16.msra.mxu0 %v1085
    %1170 = vmatpush.bf16.msra.mxu0 %v1083
    %1171 = vmatpush.bf16.msra.mxu0 %v1081
    %1172 = vmatpush.bf16.msra.mxu0 %v1079
    %1173 = vmatpush.bf16.msra.mxu0 %v1077
    %1174 = vmatmul.bf16.gmra.mxu0 %v978
    %v1175 = vpop.f32.mrf.mxu0
    %v1176 = vadd.f32 0.0, %v1175
    %v1177 = vpop.f32.mrf.mxu0
    %1178 = vdwg.mxu0
    %1179 = vmatpush.bf16.msra.mxu0 %v1107
    %1180 = vmatpush.bf16.msra.mxu0 %v1105
    %1181 = vmatpush.bf16.msra.mxu0 %v1103
    %1182 = vmatpush.bf16.msra.mxu0 %v1101
    %1183 = vmatpush.bf16.msra.mxu0 %v1099
    %1184 = vmatpush.bf16.msra.mxu0 %v1097
    %1185 = vmatpush.bf16.msra.mxu0 %v1095
    %1186 = vmatpush.bf16.msra.mxu0 %v1093
    %1187 = vmatmul.bf16.gmra.mxu0 %v979
    %v1188 = vpop.f32.mrf.mxu0
    %v1189 = vadd.f32 %v1176, %v1188
    %v1190 = vpop.f32.mrf.mxu0
    %1191 = vdwg.mxu0
    %s1192 = scalar_lea.vmem [#allocation9], 3
    %v1193 = vld [vmem:[%s1192] ss:$8 sm:$0x3]
    %s1194 = scalar_lea.vmem [#allocation9], 16
    %v1195 = vld [vmem:[%s1194] ss:$8 sm:$0x3]
    %v1196 = vrot.slane %v1163, 4
    %v1197 = vadd.f32 %v1163, %v1196
    %v1198 = vrot.slane %v1197, 2
    %v1199 = vadd.f32 %v1197, %v1198
    %v1200 = vrot.slane %v1199, 1
    %v1201 = vadd.f32 %v1199, %v1200
    %v1202 = vrot.slane %v1189, 4
    %v1203 = vadd.f32 %v1189, %v1202
    %v1204 = vrot.slane %v1203, 2
    %v1205 = vadd.f32 %v1203, %v1204
    %v1206 = vrot.slane %v1205, 1
    %v1207 = vadd.f32 %v1205, %v1206
    %v1208 = vmul.f32 %v1201, 0.125
    %v1209 = vmul.f32 %v1207, 0.125
    %v1210 = vmul.f32 %v1163, %v1163
    %v1211 = vmul.f32 %v1189, %v1189
    %v1212 = vrot.slane %v1210, 4
    %v1213 = vadd.f32 %v1210, %v1212
    %v1214 = vrot.slane %v1213, 2
    %v1215 = vadd.f32 %v1213, %v1214
    %v1216 = vrot.slane %v1215, 1
    %v1217 = vadd.f32 %v1215, %v1216
    %v1218 = vrot.slane %v1211, 4
    %v1219 = vadd.f32 %v1211, %v1218
    %v1220 = vrot.slane %v1219, 2
    %v1221 = vadd.f32 %v1219, %v1220
    %v1222 = vrot.slane %v1221, 1
    %v1223 = vadd.f32 %v1221, %v1222
    %v1224 = vmul.f32 %v1217, 0.125
    %v1225 = vmul.f32 %v1223, 0.125
    %v1226 = vmul.f32 %v1208, %v1208
    %v1227 = vmul.f32 %v1209, %v1209
    %v1228 = vsub.f32 %v1224, %v1226
    %v1229 = vsub.f32 %v1225, %v1227
    %v1230 = vadd.f32 %v1228, 1e-05
    %v1231 = vadd.f32 %v1229, 1e-05
    %v1232 = vrsqrt.pop %v1230
    %v1233 = vmul.f32 %v1232, %v1230
    %v1234 = vmul.f32 %v1233, %v1232
    %v1235 = vmul.f32 0.5, %v1234
    %v1236 = vsub.f32 1.5, %v1235
    %v1237 = vmul.f32 %v1232, %v1236
    %vm1238 = vweird.f32 %v1230
    %vm1239 = vweird.f32 %v1232
    %vm1240 = vmor %vm1238, %vm1239
    %v1241 = vsel %vm1240, %v1232, %v1237
    %v1242 = vrsqrt.pop %v1231
    %v1243 = vmul.f32 %v1242, %v1231
    %v1244 = vmul.f32 %v1243, %v1242
    %v1245 = vmul.f32 0.5, %v1244
    %v1246 = vsub.f32 1.5, %v1245
    %v1247 = vmul.f32 %v1242, %v1246
    %vm1248 = vweird.f32 %v1231
    %vm1249 = vweird.f32 %v1242
    %vm1250 = vmor %vm1248, %vm1249
    %v1251 = vsel %vm1250, %v1242, %v1247
    %v1254 = vrot.slane %v1251, 7
    %v1255 = vsel %vm197, %v1241, %v1254
    %v1257 = vmul.f32 %v1193, %v1255
    %v1259 = vperm.slane %v1257, 0
    %v1260 = vperm.slane %v1257, 1
    %v1263 = vmul.f32 %v1208, %v1259
    %v1264 = vmul.f32 %v1209, %v1260
    %v1267 = vrot.slane %v1264, 7
    %v1268 = vsel %vm197, %v1263, %v1267
    %v1270 = vsub.f32 %v1195, %v1268
    %v1271 = vmul.f32 %v1163, %v1259
    %v1272 = vmul.f32 %v1189, %v1260
    %v1274 = vperm.slane %v1270, 0
    %v1275 = vperm.slane %v1270, 1
    %v1278 = vadd.f32 %v1271, %v1274
    %v1279 = vadd.f32 %v1272, %v1275
    %v1280 = vmax.f32 %v1278, 0.0
    %v1281 = vmax.f32 %v1279, 0.0
    %s1282 = sshll.u32 %s226, 4
    %1283 = dma.done %s230, %s1282
    // Predicated region
    $region42: #{tpu_custom_call.1} parent=1 // pred_check
      _
    $region43: #{tpu_custom_call.1} parent=1 // pred_check_branch
      %1285 = sbr.rel target = $region45
    $region44: #{tpu_custom_call.1} parent=1 // pred_region
      %1286 = sst [smem:[#allocation13]] [#allocation22]
      %1287 = sst [smem:[#allocation14]] [#allocation21]
    $region45: #{tpu_custom_call.1} parent=1 // pred_fallthru
      _
    %1289 = shalt.err (0)
    %s1291 = sshll.u32 %s7, 4
    %s1292 = int_to_ptr.hbm [resolvable:$true] %s1291
    %s1293 = sshll.u32 [#allocation2], 4
    %s1294 = int_to_ptr.vmem [resolvable:$true] %s1293
    %1296 = dma.hbm_to_vmem [thread:$0]  %s1292, 4096, %s1294, [#allocation3]
    %v1297 = vld [vmem:[%s229] sm:$0xff]
    %v1298 = vld [vmem:[%s229 + $0x8] sm:$0xff]
    %v1299 = vld [vmem:[%s229 + $0x10] sm:$0xff]
    %v1300 = vld [vmem:[%s229 + $0x18] sm:$0xff]
    %v1301 = vld [vmem:[%s229 + $0x20] sm:$0xff]
    %v1302 = vld [vmem:[%s229 + $0x28] sm:$0xff]
    %v1303 = vld [vmem:[%s229 + $0x30] sm:$0xff]
    %v1304 = vld [vmem:[%s229 + $0x38] sm:$0xff]
    %v1305 = vld [vmem:[%s229 + $0x40] sm:$0xff]
    %v1306 = vld [vmem:[%s229 + $0x48] sm:$0xff]
    %v1307 = vld [vmem:[%s229 + $0x50] sm:$0xff]
    %v1308 = vld [vmem:[%s229 + $0x58] sm:$0xff]
    %v1309 = vld [vmem:[%s229 + $0x60] sm:$0xff]
    %v1310 = vld [vmem:[%s229 + $0x68] sm:$0xff]
    %v1311 = vld [vmem:[%s229 + $0x70] sm:$0xff]
    %v1312 = vld [vmem:[%s229 + $0x78] sm:$0xff]
    %v1313 = vld [vmem:[%s229 + $0x80] sm:$0xff]
    %v1314 = vld [vmem:[%s229 + $0x88] sm:$0xff]
    %v1315 = vld [vmem:[%s229 + $0x90] sm:$0xff]
    %v1316 = vld [vmem:[%s229 + $0x98] sm:$0xff]
    %v1317 = vld [vmem:[%s229 + $0xa0] sm:$0xff]
    %v1318 = vld [vmem:[%s229 + $0xa8] sm:$0xff]
    %v1319 = vld [vmem:[%s229 + $0xb0] sm:$0xff]
    %v1320 = vld [vmem:[%s229 + $0xb8] sm:$0xff]
    %v1321 = vld [vmem:[%s229 + $0xc0] sm:$0xff]
    %v1322 = vld [vmem:[%s229 + $0xc8] sm:$0xff]
    %v1323 = vld [vmem:[%s229 + $0xd0] sm:$0xff]
    %v1324 = vld [vmem:[%s229 + $0xd8] sm:$0xff]
    %v1325 = vld [vmem:[%s229 + $0xe0] sm:$0xff]
    %v1326 = vld [vmem:[%s229 + $0xe8] sm:$0xff]
    %v1327 = vld [vmem:[%s229 + $0xf0] sm:$0xff]
    %v1328 = vld [vmem:[%s229 + $0xf8] sm:$0xff]
    %v1329 = vpack.c.bf16 %v1280, %v1280
    %v1330 = vpack.c.bf16 %v1281, %v1281
    %v1363 = vunpack.c.l.b16 %v1297
    %v1364 = vunpack.c.h.b16 %v1297
    %v1365 = vunpack.c.l.b16 %v1298
    %v1366 = vunpack.c.h.b16 %v1298
    %v1367 = vunpack.c.l.b16 %v1299
    %v1368 = vunpack.c.h.b16 %v1299
    %v1369 = vunpack.c.l.b16 %v1300
    %v1370 = vunpack.c.h.b16 %v1300
    %v1371 = vunpack.c.l.b16 %v1301
    %v1372 = vunpack.c.h.b16 %v1301
    %v1373 = vunpack.c.l.b16 %v1302
    %v1374 = vunpack.c.h.b16 %v1302
    %v1375 = vunpack.c.l.b16 %v1303
    %v1376 = vunpack.c.h.b16 %v1303
    %v1377 = vunpack.c.l.b16 %v1304
    %v1378 = vunpack.c.h.b16 %v1304
    %v1379 = vunpack.c.l.b16 %v1305
    %v1380 = vunpack.c.h.b16 %v1305
    %v1381 = vunpack.c.l.b16 %v1306
    %v1382 = vunpack.c.h.b16 %v1306
    %v1383 = vunpack.c.l.b16 %v1307
    %v1384 = vunpack.c.h.b16 %v1307
    %v1385 = vunpack.c.l.b16 %v1308
    %v1386 = vunpack.c.h.b16 %v1308
    %v1387 = vunpack.c.l.b16 %v1309
    %v1388 = vunpack.c.h.b16 %v1309
    %v1389 = vunpack.c.l.b16 %v1310
    %v1390 = vunpack.c.h.b16 %v1310
    %v1391 = vunpack.c.l.b16 %v1311
    %v1392 = vunpack.c.h.b16 %v1311
    %v1393 = vunpack.c.l.b16 %v1312
    %v1394 = vunpack.c.h.b16 %v1312
    %v1395 = vunpack.c.l.b16 %v1313
    %v1396 = vunpack.c.h.b16 %v1313
    %v1397 = vunpack.c.l.b16 %v1314
    %v1398 = vunpack.c.h.b16 %v1314
    %v1399 = vunpack.c.l.b16 %v1315
    %v1400 = vunpack.c.h.b16 %v1315
    %v1401 = vunpack.c.l.b16 %v1316
    %v1402 = vunpack.c.h.b16 %v1316
    %v1403 = vunpack.c.l.b16 %v1317
    %v1404 = vunpack.c.h.b16 %v1317
    %v1405 = vunpack.c.l.b16 %v1318
    %v1406 = vunpack.c.h.b16 %v1318
    %v1407 = vunpack.c.l.b16 %v1319
    %v1408 = vunpack.c.h.b16 %v1319
    %v1409 = vunpack.c.l.b16 %v1320
    %v1410 = vunpack.c.h.b16 %v1320
    %v1411 = vunpack.c.l.b16 %v1321
    %v1412 = vunpack.c.h.b16 %v1321
    %v1413 = vunpack.c.l.b16 %v1322
    %v1414 = vunpack.c.h.b16 %v1322
    %v1415 = vunpack.c.l.b16 %v1323
    %v1416 = vunpack.c.h.b16 %v1323
    %v1417 = vunpack.c.l.b16 %v1324
    %v1418 = vunpack.c.h.b16 %v1324
    %v1419 = vunpack.c.l.b16 %v1325
    %v1420 = vunpack.c.h.b16 %v1325
    %v1421 = vunpack.c.l.b16 %v1326
    %v1422 = vunpack.c.h.b16 %v1326
    %v1423 = vunpack.c.l.b16 %v1327
    %v1424 = vunpack.c.h.b16 %v1327
    %v1425 = vunpack.c.l.b16 %v1328
    %v1426 = vunpack.c.h.b16 %v1328
    %v1427 = vpack.c.b16 %v1365, %v1363
    %v1428 = vpack.c.b16 %v1366, %v1364
    %v1429 = vpack.c.b16 %v1369, %v1367
    %v1430 = vpack.c.b16 %v1370, %v1368
    %v1431 = vpack.c.b16 %v1373, %v1371
    %v1432 = vpack.c.b16 %v1374, %v1372
    %v1433 = vpack.c.b16 %v1377, %v1375
    %v1434 = vpack.c.b16 %v1378, %v1376
    %v1435 = vpack.c.b16 %v1381, %v1379
    %v1436 = vpack.c.b16 %v1382, %v1380
    %v1437 = vpack.c.b16 %v1385, %v1383
    %v1438 = vpack.c.b16 %v1386, %v1384
    %v1439 = vpack.c.b16 %v1389, %v1387
    %v1440 = vpack.c.b16 %v1390, %v1388
    %v1441 = vpack.c.b16 %v1393, %v1391
    %v1442 = vpack.c.b16 %v1394, %v1392
    %v1443 = vpack.c.b16 %v1397, %v1395
    %v1444 = vpack.c.b16 %v1398, %v1396
    %v1445 = vpack.c.b16 %v1401, %v1399
    %v1446 = vpack.c.b16 %v1402, %v1400
    %v1447 = vpack.c.b16 %v1405, %v1403
    %v1448 = vpack.c.b16 %v1406, %v1404
    %v1449 = vpack.c.b16 %v1409, %v1407
    %v1450 = vpack.c.b16 %v1410, %v1408
    %v1451 = vpack.c.b16 %v1413, %v1411
    %v1452 = vpack.c.b16 %v1414, %v1412
    %v1453 = vpack.c.b16 %v1417, %v1415
    %v1454 = vpack.c.b16 %v1418, %v1416
    %v1455 = vpack.c.b16 %v1421, %v1419
    %v1456 = vpack.c.b16 %v1422, %v1420
    %v1457 = vpack.c.b16 %v1425, %v1423
    %v1458 = vpack.c.b16 %v1426, %v1424
    %1491 = vmatpush.bf16.msra.mxu0 %v1441
    %1492 = vmatpush.bf16.msra.mxu0 %v1439
    %1493 = vmatpush.bf16.msra.mxu0 %v1437
    %1494 = vmatpush.bf16.msra.mxu0 %v1435
    %1495 = vmatpush.bf16.msra.mxu0 %v1433
    %1496 = vmatpush.bf16.msra.mxu0 %v1431
    %1497 = vmatpush.bf16.msra.mxu0 %v1429
    %1498 = vmatpush.bf16.msra.mxu0 %v1427
    %1499 = vmatmul.bf16.gmra.mxu0 %v1329
    %v1500 = vpop.f32.mrf.mxu0
    %v1501 = vadd.f32 0.0, %v1500
    %v1502 = vpop.f32.mrf.mxu0
    %1503 = vdwg.mxu0
    %1504 = vmatpush.bf16.msra.mxu0 %v1457
    %1505 = vmatpush.bf16.msra.mxu0 %v1455
    %1506 = vmatpush.bf16.msra.mxu0 %v1453
    %1507 = vmatpush.bf16.msra.mxu0 %v1451
    %1508 = vmatpush.bf16.msra.mxu0 %v1449
    %1509 = vmatpush.bf16.msra.mxu0 %v1447
    %1510 = vmatpush.bf16.msra.mxu0 %v1445
    %1511 = vmatpush.bf16.msra.mxu0 %v1443
    %1512 = vmatmul.bf16.gmra.mxu0 %v1330
    %v1513 = vpop.f32.mrf.mxu0
    %v1514 = vadd.f32 %v1501, %v1513
    %v1515 = vpop.f32.mrf.mxu0
    %1516 = vdwg.mxu0
    %1517 = vmatpush.bf16.msra.mxu0 %v1442
    %1518 = vmatpush.bf16.msra.mxu0 %v1440
    %1519 = vmatpush.bf16.msra.mxu0 %v1438
    %1520 = vmatpush.bf16.msra.mxu0 %v1436
    %1521 = vmatpush.bf16.msra.mxu0 %v1434
    %1522 = vmatpush.bf16.msra.mxu0 %v1432
    %1523 = vmatpush.bf16.msra.mxu0 %v1430
    %1524 = vmatpush.bf16.msra.mxu0 %v1428
    %1525 = vmatmul.bf16.gmra.mxu0 %v1329
    %v1526 = vpop.f32.mrf.mxu0
    %v1527 = vadd.f32 0.0, %v1526
    %v1528 = vpop.f32.mrf.mxu0
    %1529 = vdwg.mxu0
    %1530 = vmatpush.bf16.msra.mxu0 %v1458
    %1531 = vmatpush.bf16.msra.mxu0 %v1456
    %1532 = vmatpush.bf16.msra.mxu0 %v1454
    %1533 = vmatpush.bf16.msra.mxu0 %v1452
    %1534 = vmatpush.bf16.msra.mxu0 %v1450
    %1535 = vmatpush.bf16.msra.mxu0 %v1448
    %1536 = vmatpush.bf16.msra.mxu0 %v1446
    %1537 = vmatpush.bf16.msra.mxu0 %v1444
    %1538 = vmatmul.bf16.gmra.mxu0 %v1330
    %v1539 = vpop.f32.mrf.mxu0
    %v1540 = vadd.f32 %v1527, %v1539
    %v1541 = vpop.f32.mrf.mxu0
    %1542 = vdwg.mxu0
    %s1543 = scalar_lea.vmem [#allocation9], 4
    %v1544 = vld [vmem:[%s1543] ss:$8 sm:$0x3]
    %s1545 = scalar_lea.vmem [#allocation9], 17
    %v1546 = vld [vmem:[%s1545] ss:$8 sm:$0x3]
    %v1547 = vrot.slane %v1514, 4
    %v1548 = vadd.f32 %v1514, %v1547
    %v1549 = vrot.slane %v1548, 2
    %v1550 = vadd.f32 %v1548, %v1549
    %v1551 = vrot.slane %v1550, 1
    %v1552 = vadd.f32 %v1550, %v1551
    %v1553 = vrot.slane %v1540, 4
    %v1554 = vadd.f32 %v1540, %v1553
    %v1555 = vrot.slane %v1554, 2
    %v1556 = vadd.f32 %v1554, %v1555
    %v1557 = vrot.slane %v1556, 1
    %v1558 = vadd.f32 %v1556, %v1557
    %v1559 = vmul.f32 %v1552, 0.125
    %v1560 = vmul.f32 %v1558, 0.125
    %v1561 = vmul.f32 %v1514, %v1514
    %v1562 = vmul.f32 %v1540, %v1540
    %v1563 = vrot.slane %v1561, 4
    %v1564 = vadd.f32 %v1561, %v1563
    %v1565 = vrot.slane %v1564, 2
    %v1566 = vadd.f32 %v1564, %v1565
    %v1567 = vrot.slane %v1566, 1
    %v1568 = vadd.f32 %v1566, %v1567
    %v1569 = vrot.slane %v1562, 4
    %v1570 = vadd.f32 %v1562, %v1569
    %v1571 = vrot.slane %v1570, 2
    %v1572 = vadd.f32 %v1570, %v1571
    %v1573 = vrot.slane %v1572, 1
    %v1574 = vadd.f32 %v1572, %v1573
    %v1575 = vmul.f32 %v1568, 0.125
    %v1576 = vmul.f32 %v1574, 0.125
    %v1577 = vmul.f32 %v1559, %v1559
    %v1578 = vmul.f32 %v1560, %v1560
    %v1579 = vsub.f32 %v1575, %v1577
    %v1580 = vsub.f32 %v1576, %v1578
    %v1581 = vadd.f32 %v1579, 1e-05
    %v1582 = vadd.f32 %v1580, 1e-05
    %v1583 = vrsqrt.pop %v1581
    %v1584 = vmul.f32 %v1583, %v1581
    %v1585 = vmul.f32 %v1584, %v1583
    %v1586 = vmul.f32 0.5, %v1585
    %v1587 = vsub.f32 1.5, %v1586
    %v1588 = vmul.f32 %v1583, %v1587
    %vm1589 = vweird.f32 %v1581
    %vm1590 = vweird.f32 %v1583
    %vm1591 = vmor %vm1589, %vm1590
    %v1592 = vsel %vm1591, %v1583, %v1588
    %v1593 = vrsqrt.pop %v1582
    %v1594 = vmul.f32 %v1593, %v1582
    %v1595 = vmul.f32 %v1594, %v1593
    %v1596 = vmul.f32 0.5, %v1595
    %v1597 = vsub.f32 1.5, %v1596
    %v1598 = vmul.f32 %v1593, %v1597
    %vm1599 = vweird.f32 %v1582
    %vm1600 = vweird.f32 %v1593
    %vm1601 = vmor %vm1599, %vm1600
    %v1602 = vsel %vm1601, %v1593, %v1598
    %v1605 = vrot.slane %v1602, 7
    %v1606 = vsel %vm197, %v1592, %v1605
    %v1608 = vmul.f32 %v1544, %v1606
    %v1610 = vperm.slane %v1608, 0
    %v1611 = vperm.slane %v1608, 1
    %v1614 = vmul.f32 %v1559, %v1610
    %v1615 = vmul.f32 %v1560, %v1611
    %v1618 = vrot.slane %v1615, 7
    %v1619 = vsel %vm197, %v1614, %v1618
    %v1621 = vsub.f32 %v1546, %v1619
    %v1622 = vmul.f32 %v1514, %v1610
    %v1623 = vmul.f32 %v1540, %v1611
    %v1625 = vperm.slane %v1621, 0
    %v1626 = vperm.slane %v1621, 1
    %v1629 = vadd.f32 %v1622, %v1625
    %v1630 = vadd.f32 %v1623, %v1626
    %v1631 = vmax.f32 %v1629, 0.0
    %v1632 = vmax.f32 %v1630, 0.0
    %s1633 = sshll.u32 %s226, 4
    %1634 = dma.done [#allocation3], %s1633
    %v1635 = vld [vmem:[#allocation2] sm:$0xff]
    %v1636 = vld [vmem:[#allocation2 + $0x8] sm:$0xff]
    %v1637 = vld [vmem:[#allocation2 + $0x10] sm:$0xff]
    %v1638 = vld [vmem:[#allocation2 + $0x18] sm:$0xff]
    %v1639 = vld [vmem:[#allocation2 + $0x20] sm:$0xff]
    %v1640 = vld [vmem:[#allocation2 + $0x28] sm:$0xff]
    %v1641 = vld [vmem:[#allocation2 + $0x30] sm:$0xff]
    %v1642 = vld [vmem:[#allocation2 + $0x38] sm:$0xff]
    %v1643 = vld [vmem:[#allocation2 + $0x40] sm:$0xff]
    %v1644 = vld [vmem:[#allocation2 + $0x48] sm:$0xff]
    %v1645 = vld [vmem:[#allocation2 + $0x50] sm:$0xff]
    %v1646 = vld [vmem:[#allocation2 + $0x58] sm:$0xff]
    %v1647 = vld [vmem:[#allocation2 + $0x60] sm:$0xff]
    %v1648 = vld [vmem:[#allocation2 + $0x68] sm:$0xff]
    %v1649 = vld [vmem:[#allocation2 + $0x70] sm:$0xff]
    %v1650 = vld [vmem:[#allocation2 + $0x78] sm:$0xff]
    %v1651 = vld [vmem:[#allocation2 + $0x80] sm:$0xff]
    %v1652 = vld [vmem:[#allocation2 + $0x88] sm:$0xff]
    %v1653 = vld [vmem:[#allocation2 + $0x90] sm:$0xff]
    %v1654 = vld [vmem:[#allocation2 + $0x98] sm:$0xff]
    %v1655 = vld [vmem:[#allocation2 + $0xa0] sm:$0xff]
    %v1656 = vld [vmem:[#allocation2 + $0xa8] sm:$0xff]
    %v1657 = vld [vmem:[#allocation2 + $0xb0] sm:$0xff]
    %v1658 = vld [vmem:[#allocation2 + $0xb8] sm:$0xff]
    %v1659 = vld [vmem:[#allocation2 + $0xc0] sm:$0xff]
    %v1660 = vld [vmem:[#allocation2 + $0xc8] sm:$0xff]
    %v1661 = vld [vmem:[#allocation2 + $0xd0] sm:$0xff]
    %v1662 = vld [vmem:[#allocation2 + $0xd8] sm:$0xff]
    %v1663 = vld [vmem:[#allocation2 + $0xe0] sm:$0xff]
    %v1664 = vld [vmem:[#allocation2 + $0xe8] sm:$0xff]
    %v1665 = vld [vmem:[#allocation2 + $0xf0] sm:$0xff]
    %v1666 = vld [vmem:[#allocation2 + $0xf8] sm:$0xff]
    %v1667 = vpack.c.bf16 %v1631, %v1631
    %v1668 = vpack.c.bf16 %v1632, %v1632
    %s1669 = scalar_lea.vmem [#allocation9], 18
    %v1670 = vld [vmem:[%s1669] ss:$8 sm:$0x3]
    %v1672 = vperm.slane %v1670, 0
    %v1673 = vperm.slane %v1670, 1
    %v1708 = vunpack.c.l.b16 %v1635
    %v1709 = vunpack.c.h.b16 %v1635
    %v1710 = vunpack.c.l.b16 %v1636
    %v1711 = vunpack.c.h.b16 %v1636
    %v1712 = vunpack.c.l.b16 %v1637
    %v1713 = vunpack.c.h.b16 %v1637
    %v1714 = vunpack.c.l.b16 %v1638
    %v1715 = vunpack.c.h.b16 %v1638
    %v1716 = vunpack.c.l.b16 %v1639
    %v1717 = vunpack.c.h.b16 %v1639
    %v1718 = vunpack.c.l.b16 %v1640
    %v1719 = vunpack.c.h.b16 %v1640
    %v1720 = vunpack.c.l.b16 %v1641
    %v1721 = vunpack.c.h.b16 %v1641
    %v1722 = vunpack.c.l.b16 %v1642
    %v1723 = vunpack.c.h.b16 %v1642
    %v1724 = vunpack.c.l.b16 %v1643
    %v1725 = vunpack.c.h.b16 %v1643
    %v1726 = vunpack.c.l.b16 %v1644
    %v1727 = vunpack.c.h.b16 %v1644
    %v1728 = vunpack.c.l.b16 %v1645
    %v1729 = vunpack.c.h.b16 %v1645
    %v1730 = vunpack.c.l.b16 %v1646
    %v1731 = vunpack.c.h.b16 %v1646
    %v1732 = vunpack.c.l.b16 %v1647
    %v1733 = vunpack.c.h.b16 %v1647
    %v1734 = vunpack.c.l.b16 %v1648
    %v1735 = vunpack.c.h.b16 %v1648
    %v1736 = vunpack.c.l.b16 %v1649
    %v1737 = vunpack.c.h.b16 %v1649
    %v1738 = vunpack.c.l.b16 %v1650
    %v1739 = vunpack.c.h.b16 %v1650
    %v1740 = vunpack.c.l.b16 %v1651
    %v1741 = vunpack.c.h.b16 %v1651
    %v1742 = vunpack.c.l.b16 %v1652
    %v1743 = vunpack.c.h.b16 %v1652
    %v1744 = vunpack.c.l.b16 %v1653
    %v1745 = vunpack.c.h.b16 %v1653
    %v1746 = vunpack.c.l.b16 %v1654
    %v1747 = vunpack.c.h.b16 %v1654
    %v1748 = vunpack.c.l.b16 %v1655
    %v1749 = vunpack.c.h.b16 %v1655
    %v1750 = vunpack.c.l.b16 %v1656
    %v1751 = vunpack.c.h.b16 %v1656
    %v1752 = vunpack.c.l.b16 %v1657
    %v1753 = vunpack.c.h.b16 %v1657
    %v1754 = vunpack.c.l.b16 %v1658
    %v1755 = vunpack.c.h.b16 %v1658
    %v1756 = vunpack.c.l.b16 %v1659
    %v1757 = vunpack.c.h.b16 %v1659
    %v1758 = vunpack.c.l.b16 %v1660
    %v1759 = vunpack.c.h.b16 %v1660
    %v1760 = vunpack.c.l.b16 %v1661
    %v1761 = vunpack.c.h.b16 %v1661
    %v1762 = vunpack.c.l.b16 %v1662
    %v1763 = vunpack.c.h.b16 %v1662
    %v1764 = vunpack.c.l.b16 %v1663
    %v1765 = vunpack.c.h.b16 %v1663
    %v1766 = vunpack.c.l.b16 %v1664
    %v1767 = vunpack.c.h.b16 %v1664
    %v1768 = vunpack.c.l.b16 %v1665
    %v1769 = vunpack.c.h.b16 %v1665
    %v1770 = vunpack.c.l.b16 %v1666
    %v1771 = vunpack.c.h.b16 %v1666
    %v1772 = vpack.c.b16 %v1710, %v1708
    %v1773 = vpack.c.b16 %v1711, %v1709
    %v1774 = vpack.c.b16 %v1714, %v1712
    %v1775 = vpack.c.b16 %v1715, %v1713
    %v1776 = vpack.c.b16 %v1718, %v1716
    %v1777 = vpack.c.b16 %v1719, %v1717
    %v1778 = vpack.c.b16 %v1722, %v1720
    %v1779 = vpack.c.b16 %v1723, %v1721
    %v1780 = vpack.c.b16 %v1726, %v1724
    %v1781 = vpack.c.b16 %v1727, %v1725
    %v1782 = vpack.c.b16 %v1730, %v1728
    %v1783 = vpack.c.b16 %v1731, %v1729
    %v1784 = vpack.c.b16 %v1734, %v1732
    %v1785 = vpack.c.b16 %v1735, %v1733
    %v1786 = vpack.c.b16 %v1738, %v1736
    %v1787 = vpack.c.b16 %v1739, %v1737
    %v1788 = vpack.c.b16 %v1742, %v1740
    %v1789 = vpack.c.b16 %v1743, %v1741
    %v1790 = vpack.c.b16 %v1746, %v1744
    %v1791 = vpack.c.b16 %v1747, %v1745
    %v1792 = vpack.c.b16 %v1750, %v1748
    %v1793 = vpack.c.b16 %v1751, %v1749
    %v1794 = vpack.c.b16 %v1754, %v1752
    %v1795 = vpack.c.b16 %v1755, %v1753
    %v1796 = vpack.c.b16 %v1758, %v1756
    %v1797 = vpack.c.b16 %v1759, %v1757
    %v1798 = vpack.c.b16 %v1762, %v1760
    %v1799 = vpack.c.b16 %v1763, %v1761
    %v1800 = vpack.c.b16 %v1766, %v1764
    %v1801 = vpack.c.b16 %v1767, %v1765
    %v1802 = vpack.c.b16 %v1770, %v1768
    %v1803 = vpack.c.b16 %v1771, %v1769
    %1836 = vmatpush.bf16.msra.mxu0 %v1786
    %1837 = vmatpush.bf16.msra.mxu0 %v1784
    %1838 = vmatpush.bf16.msra.mxu0 %v1782
    %1839 = vmatpush.bf16.msra.mxu0 %v1780
    %1840 = vmatpush.bf16.msra.mxu0 %v1778
    %1841 = vmatpush.bf16.msra.mxu0 %v1776
    %1842 = vmatpush.bf16.msra.mxu0 %v1774
    %1843 = vmatpush.bf16.msra.mxu0 %v1772
    %1844 = vmatmul.bf16.gmra.mxu0 %v1667
    %v1845 = vpop.f32.mrf.mxu0
    %v1846 = vadd.f32 %v1672, %v1845
    %v1847 = vpop.f32.mrf.mxu0
    %1848 = vdwg.mxu0
    %1849 = vmatpush.bf16.msra.mxu0 %v1802
    %1850 = vmatpush.bf16.msra.mxu0 %v1800
    %1851 = vmatpush.bf16.msra.mxu0 %v1798
    %1852 = vmatpush.bf16.msra.mxu0 %v1796
    %1853 = vmatpush.bf16.msra.mxu0 %v1794
    %1854 = vmatpush.bf16.msra.mxu0 %v1792
    %1855 = vmatpush.bf16.msra.mxu0 %v1790
    %1856 = vmatpush.bf16.msra.mxu0 %v1788
    %1857 = vmatmul.bf16.gmra.mxu0 %v1668
    %v1858 = vpop.f32.mrf.mxu0
    %v1859 = vadd.f32 %v1846, %v1858
    %v1860 = vpop.f32.mrf.mxu0
    %1861 = vdwg.mxu0
    %1862 = vmatpush.bf16.msra.mxu0 %v1787
    %1863 = vmatpush.bf16.msra.mxu0 %v1785
    %1864 = vmatpush.bf16.msra.mxu0 %v1783
    %1865 = vmatpush.bf16.msra.mxu0 %v1781
    %1866 = vmatpush.bf16.msra.mxu0 %v1779
    %1867 = vmatpush.bf16.msra.mxu0 %v1777
    %1868 = vmatpush.bf16.msra.mxu0 %v1775
    %1869 = vmatpush.bf16.msra.mxu0 %v1773
    %1870 = vmatmul.bf16.gmra.mxu0 %v1667
    %v1871 = vpop.f32.mrf.mxu0
    %v1872 = vadd.f32 %v1673, %v1871
    %v1873 = vpop.f32.mrf.mxu0
    %1874 = vdwg.mxu0
    %1875 = vmatpush.bf16.msra.mxu0 %v1803
    %1876 = vmatpush.bf16.msra.mxu0 %v1801
    %1877 = vmatpush.bf16.msra.mxu0 %v1799
    %1878 = vmatpush.bf16.msra.mxu0 %v1797
    %1879 = vmatpush.bf16.msra.mxu0 %v1795
    %1880 = vmatpush.bf16.msra.mxu0 %v1793
    %1881 = vmatpush.bf16.msra.mxu0 %v1791
    %1882 = vmatpush.bf16.msra.mxu0 %v1789
    %1883 = vmatmul.bf16.gmra.mxu0 %v1668
    %v1884 = vpop.f32.mrf.mxu0
    %v1885 = vadd.f32 %v1872, %v1884
    %v1886 = vpop.f32.mrf.mxu0
    %1887 = vdwg.mxu0
    %1888 = vst [vmem:[#allocation10] sm:$0xff] %v1859
    %1889 = vst [vmem:[#allocation10 + $0x8] sm:$0xff] %v1885
    // Predicated region
    $region46: #{tpu_custom_call.1} parent=1 // pred_check
      _
    $region47: #{tpu_custom_call.1} parent=1 // pred_check_branch
      %1891 = sbr.rel (0) target = $region49
    $region48: #{tpu_custom_call.1} parent=1 // pred_region
      %1893 = vsyncadd [#allocation6], 0
      %s1895 = sshll.u32 [#allocation10], 4
      %s1896 = int_to_ptr.vmem [resolvable:$true] %s1895
      %s1897 = sshll.u32 %s8, 4
      %s1898 = int_to_ptr.hbm [resolvable:$true] %s1897
      %1900 = dma.vmem_to_hbm [thread:$0]  %s1896, 256, %s1898, [#allocation6]
    $region49: #{tpu_custom_call.1} parent=1 // pred_fallthru
      _
    // Predicated region
    $region50: #{tpu_custom_call.1} parent=1 // pred_check
      _
    $region51: #{tpu_custom_call.1} parent=1 // pred_check_branch
      %1902 = sbr.rel (0) target = $region53
    $region52: #{tpu_custom_call.1} parent=1 // pred_region
      %1904 = dma.done [#allocation6], 256
    $region53: #{tpu_custom_call.1} parent=1 // pred_fallthru
      _
    %1905 = vsyncpa [#allocation5], 1
    %1906 = vsyncpa [#allocation8], 1
    %1907 = vsyncpa [#allocation6], 1
  %1908 = vsyncmov [#allocation3]
  %s1909 = vpop.sfrf %1908
  %p1910 = scmp.eq.s32.totalorder %s1909, 0
  %p1911 = pneg %p1910
  %1913 = shalt.err (%p1911)
  %s1914 = scalar_lea.sflag [#allocation3], 1
  %1915 = vsyncmov %s1914
  %s1916 = vpop.sfrf %1915
  %p1917 = scmp.eq.s32.totalorder %s1916, 0
  %p1918 = pneg %p1917
  %1920 = shalt.err (%p1918)

</llo_original>
